<compile_context>
chip_gen: v6e
topology: v6e:2x2x1
jax: 0.10.0
libtpu: 0.0.40
codegen_flags: <defaults>
</compile_context>

<pallas_src>
import jax
import jax.numpy as jnp
from jax.experimental import pallas as pl
from jax.experimental.pallas import tpu as pltpu

_MIB = 1024 * 1024


def _round_down_mult(x, m):
    return max(m, (x // m) * m)


def _physical_vmem_bytes():
    """Per-core VMEM capacity; conservative 64 MiB (v7x) fallback if query fails."""
    try:
        info = pltpu.get_tpu_info()
        cap = getattr(info, "vmem_capacity_bytes", None)
        if cap:
            return int(cap)
    except Exception:
        pass
    return 64 * _MIB


def _multicg_kernel(x_ref, w_ref, o_ref):
    # x_ref: (tq, tnd, dim)        query/node row tile of node_feat
    # w_ref: (tc, dim, dim)        channel weights (VMEM resident across inner axes)
    # o_ref: (tq, tc, tnd, dim)    lane-dense stores when dim % 128 == 0
    tq = o_ref.shape[0]
    tc = o_ref.shape[1]
    for qi in range(tq):                 # static unroll; tq*tc kept <= 128 dots
        x = x_ref[qi]                    # (tnd, dim)
        for ci in range(tc):
            o_ref[qi, ci] = jnp.dot(
                x, w_ref[ci], preferred_element_type=jnp.float32
            ).astype(o_ref.dtype)


def _pick_tiles(nq, nd, dim, c, in_elt, out_elt, budget_bytes, max_unrolled=128):
    """Pick (tq, tnd, tc) so the working set fits the per-chip VMEM budget."""

    def need(tq, tnd, tc):
        x_bytes = 2 * tq * tnd * dim * in_elt          # double-buffered input tile
        w_bytes = tc * dim * dim * in_elt              # resident (single-buffered) weights
        o_bytes = 2 * tq * tc * tnd * dim * out_elt    # double-buffered output tile
        return x_bytes + w_bytes + o_bytes

    tnd = nd if nd <= 512 else 512                     # multiple of 8 unless == nd
    tc = min(c, max_unrolled)
    tq = 1
    # Pack several queries per grid step when nd is small (amortize step overhead).
    while (tq * 2 <= nq and tq * 2 * tc <= max_unrolled
           and need(tq * 2, tnd, tc) <= budget_bytes):
        tq *= 2
    # Shrink priority: tq -> tnd (floor ~128) -> tc (causes x re-reads) -> tnd (floor 8).
    while need(tq, tnd, tc) > budget_bytes and tq > 1:
        tq //= 2
    while need(tq, tnd, tc) > budget_bytes and tnd > 128:
        tnd = _round_down_mult(tnd // 2, 8)
    while need(tq, tnd, tc) > budget_bytes and tc > 1:
        tc = (tc + 1) // 2
    while need(tq, tnd, tc) > budget_bytes and tnd > 8:
        tnd = _round_down_mult(tnd // 2, 8)
    tnd = min(tnd, nd)
    return tq, tnd, tc, need(tq, tnd, tc)


def multicg_forward(node_feat, ws, ra=0, *, out_dtype=None, use_bf16_matmul=False):
    """out[q, ci] = node_feat[q] @ ws[ci]   -> (nq, c, nd, dim)."""
    del ra  # unused in the original module's forward as well
    nq, nd, dim = node_feat.shape
    c, dim_w, dim_w2 = ws.shape
    assert dim_w == dim and dim_w2 == dim

    if out_dtype is None:
        out_dtype = node_feat.dtype
    if use_bf16_matmul:
        # Opt-in: bf16 operands, f32 MXU accumulation.  In a real module, cast
        # ws once at parameter-init time rather than per forward call.
        node_feat = node_feat.astype(jnp.bfloat16)
        ws = ws.astype(jnp.bfloat16)

    in_elt = jnp.dtype(node_feat.dtype).itemsize
    out_elt = jnp.dtype(out_dtype).itemsize

    physical = _physical_vmem_bytes()
    budget = int(0.7 * physical)
    tq, tnd, tc, vmem_need = _pick_tiles(nq, nd, dim, c, in_elt, out_elt, budget)

    c_tiles = pl.cdiv(c, tc)
    q_tiles = pl.cdiv(nq, tq)
    nd_tiles = pl.cdiv(nd, tnd)
    grid = (c_tiles, q_tiles, nd_tiles)

    # Scoped VMEM limit: generous but strictly below physical (valid on v7x 64 MiB).
    vmem_limit = int(min(0.9 * physical, max(32 * _MIB, 2 * vmem_need + 4 * _MIB)))

    cost = pl.CostEstimate(
        flops=2 * nq * nd * c * dim * dim,
        transcendentals=0,
        bytes_accessed=(c_tiles * nq * nd * dim * in_elt   # x re-read per channel tile
                        + c * dim * dim * in_elt           # weights read once
                        + nq * c * nd * dim * out_elt),    # output written once
    )

    def _run(single_buffer_weights):
        w_kwargs = {}
        if single_buffer_weights:
            w_kwargs["pipeline_mode"] = pl.Buffered(1)
        return pl.pallas_call(
            _multicg_kernel,
            out_shape=jax.ShapeDtypeStruct((nq, c, nd, dim), out_dtype),
            grid=grid,
            in_specs=[
                # streamed row tiles of node_feat (resident across the channel axis)
                pl.BlockSpec((tq, tnd, dim), lambda cj, qi, ni: (qi, ni, 0)),
                # channel-tile of weights; index constant across inner axes -> fetched once
                pl.BlockSpec((tc, dim, dim), lambda cj, qi, ni: (cj, 0, 0), **w_kwargs),
            ],
            # direct (nq, c, nd, dim) layout: no wrapper transpose / pad / slice
            out_specs=pl.BlockSpec(
                (tq, tc, tnd, dim), lambda cj, qi, ni: (qi, cj, ni, 0)
            ),
            compiler_params=pltpu.CompilerParams(
                dimension_semantics=("parallel", "parallel", "parallel"),
                vmem_limit_bytes=vmem_limit,
            ),
            cost_estimate=cost,
        )(node_feat, ws)

    try:
        return _run(True)
    except Exception:
        # Fallback: default (double) buffering if Buffered(1) is unsupported here.
        return _run(False)


if __name__ == "__main__":
    key = jax.random.PRNGKey(0)
    k_feat, k_ws, k_feat2, k_ws2 = jax.random.split(key, 4)

    # Small config consistent with the module's forward (dim, c scaled down).
    nq, nd, dim, c = 2, 8, 32, 4
    node_feat = jax.random.normal(k_feat, (nq, nd, dim), dtype=jnp.float32)
    ws = 0.1 * jax.random.uniform(k_ws, (c, dim, dim), dtype=jnp.float32)

    out = jax.block_until_ready(multicg_forward(node_feat, ws))
    ref = jnp.einsum("qnd,cde->qcne", node_feat, ws,
                     precision=jax.lax.Precision.HIGHEST)
    assert out.shape == (nq, c, nd, dim), out.shape
    assert jnp.allclose(out, ref, atol=1e-5, rtol=1e-5), "mismatch (small config)"

    # Lane-dense config (dim multiple of 128) exercising the direct-layout stores.
    nq2, nd2, dim2, c2 = 4, 16, 128, 8
    node_feat2 = jax.random.normal(k_feat2, (nq2, nd2, dim2), dtype=jnp.float32)
    ws2 = 0.1 * jax.random.uniform(k_ws2, (c2, dim2, dim2), dtype=jnp.float32)

    out2 = jax.block_until_ready(multicg_forward(node_feat2, ws2))
    ref2 = jnp.einsum("qnd,cde->qcne", node_feat2, ws2,
                      precision=jax.lax.Precision.HIGHEST)
    assert out2.shape == (nq2, c2, nd2, dim2), out2.shape
    assert jnp.allclose(out2, ref2, atol=1e-3, rtol=1e-3), "mismatch (dim=128 config)"

    print("KERNEL_OK")
</pallas_src>

<mosaic_0001>
module attributes {stable_mosaic.version = 11 : i64} {
  func.func @_multicg_kernel(%arg0: i32, %arg1: i32, %arg2: i32, %arg3: memref<2x8x32xf32, #tpu.memory_space<vmem>>, %arg4: memref<4x32x32xf32, #tpu.memory_space<vmem>>, %arg5: memref<2x4x8x32xf32, #tpu.memory_space<vmem>>) attributes {dimension_semantics = [#tpu.dimension_semantics<parallel>, #tpu.dimension_semantics<parallel>, #tpu.dimension_semantics<parallel>], iteration_bounds = array<i64: 1, 1, 1>, scalar_prefetch = 0 : i64, scratch_operands = 0 : i64, tpu.core_type = #tpu.core_type<tc>, window_params = [{transform_indices = @transform_0, window_bounds = array<i64: 2, 8, 32>}, {pipeline_mode = #tpu.pipeline_mode<synchronous>, transform_indices = @transform_1, window_bounds = array<i64: 4, 32, 32>}, {transform_indices = @transform_2, window_bounds = array<i64: 2, 4, 8, 32>}]} {
    %c0 = arith.constant 0 : index
    %c0_0 = arith.constant 0 : index
    %c0_1 = arith.constant 0 : index
    %0 = vector.load %arg3[%c0, %c0_0, %c0_1] : memref<2x8x32xf32, #tpu.memory_space<vmem>>, vector<1x8x32xf32>
    %1 = vector.shape_cast %0 : vector<1x8x32xf32> to vector<8x32xf32>
    %c0_2 = arith.constant 0 : index
    %c0_3 = arith.constant 0 : index
    %c0_4 = arith.constant 0 : index
    %2 = vector.load %arg4[%c0_2, %c0_3, %c0_4] : memref<4x32x32xf32, #tpu.memory_space<vmem>>, vector<1x32x32xf32>
    %3 = vector.shape_cast %2 : vector<1x32x32xf32> to vector<32x32xf32>
    %cst = arith.constant dense<0.000000e+00> : vector<8x32xf32>
    %4 = tpu.matmul %1, %3, %cst {dimension_numbers = #tpu.dot_dimension_numbers<[1], [0], [0], [1], [0, 0, 1, 1], [], []>} : vector<8x32xf32>, vector<32x32xf32>, vector<8x32xf32> -> vector<8x32xf32>
    %c0_5 = arith.constant 0 : index
    %c0_6 = arith.constant 0 : index
    %c0_7 = arith.constant 0 : index
    %c0_8 = arith.constant 0 : index
    %5 = vector.load %arg5[%c0_5, %c0_6, %c0_7, %c0_8] : memref<2x4x8x32xf32, #tpu.memory_space<vmem>>, vector<1x1x8x32xf32>
    %6 = vector.shape_cast %5 : vector<1x1x8x32xf32> to vector<8x32xf32>
    %7 = vector.shape_cast %4 : vector<8x32xf32> to vector<1x1x8x32xf32>
    tpu.vector_store %arg5[%c0_5, %c0_6, %c0_7, %c0_8], %7 {strides = array<i32>} : memref<2x4x8x32xf32, #tpu.memory_space<vmem>>, vector<1x1x8x32xf32>,
    %c1 = arith.constant 1 : index
    %c0_9 = arith.constant 0 : index
    %c0_10 = arith.constant 0 : index
    %8 = vector.load %arg4[%c1, %c0_9, %c0_10] : memref<4x32x32xf32, #tpu.memory_space<vmem>>, vector<1x32x32xf32>
    %9 = vector.shape_cast %8 : vector<1x32x32xf32> to vector<32x32xf32>
    %cst_11 = arith.constant dense<0.000000e+00> : vector<8x32xf32>
    %10 = tpu.matmul %1, %9, %cst_11 {dimension_numbers = #tpu.dot_dimension_numbers<[1], [0], [0], [1], [0, 0, 1, 1], [], []>} : vector<8x32xf32>, vector<32x32xf32>, vector<8x32xf32> -> vector<8x32xf32>
    %c0_12 = arith.constant 0 : index
    %c1_13 = arith.constant 1 : index
    %c0_14 = arith.constant 0 : index
    %c0_15 = arith.constant 0 : index
    %11 = vector.load %arg5[%c0_12, %c1_13, %c0_14, %c0_15] : memref<2x4x8x32xf32, #tpu.memory_space<vmem>>, vector<1x1x8x32xf32>
    %12 = vector.shape_cast %11 : vector<1x1x8x32xf32> to vector<8x32xf32>
    %13 = vector.shape_cast %10 : vector<8x32xf32> to vector<1x1x8x32xf32>
    tpu.vector_store %arg5[%c0_12, %c1_13, %c0_14, %c0_15], %13 {strides = array<i32>} : memref<2x4x8x32xf32, #tpu.memory_space<vmem>>, vector<1x1x8x32xf32>,
    %c2 = arith.constant 2 : index
    %c0_16 = arith.constant 0 : index
    %c0_17 = arith.constant 0 : index
    %14 = vector.load %arg4[%c2, %c0_16, %c0_17] : memref<4x32x32xf32, #tpu.memory_space<vmem>>, vector<1x32x32xf32>
    %15 = vector.shape_cast %14 : vector<1x32x32xf32> to vector<32x32xf32>
    %cst_18 = arith.constant dense<0.000000e+00> : vector<8x32xf32>
    %16 = tpu.matmul %1, %15, %cst_18 {dimension_numbers = #tpu.dot_dimension_numbers<[1], [0], [0], [1], [0, 0, 1, 1], [], []>} : vector<8x32xf32>, vector<32x32xf32>, vector<8x32xf32> -> vector<8x32xf32>
    %c0_19 = arith.constant 0 : index
    %c2_20 = arith.constant 2 : index
    %c0_21 = arith.constant 0 : index
    %c0_22 = arith.constant 0 : index
    %17 = vector.load %arg5[%c0_19, %c2_20, %c0_21, %c0_22] : memref<2x4x8x32xf32, #tpu.memory_space<vmem>>, vector<1x1x8x32xf32>
    %18 = vector.shape_cast %17 : vector<1x1x8x32xf32> to vector<8x32xf32>
    %19 = vector.shape_cast %16 : vector<8x32xf32> to vector<1x1x8x32xf32>
    tpu.vector_store %arg5[%c0_19, %c2_20, %c0_21, %c0_22], %19 {strides = array<i32>} : memref<2x4x8x32xf32, #tpu.memory_space<vmem>>, vector<1x1x8x32xf32>,
    %c3 = arith.constant 3 : index
    %c0_23 = arith.constant 0 : index
    %c0_24 = arith.constant 0 : index
    %20 = vector.load %arg4[%c3, %c0_23, %c0_24] : memref<4x32x32xf32, #tpu.memory_space<vmem>>, vector<1x32x32xf32>
    %21 = vector.shape_cast %20 : vector<1x32x32xf32> to vector<32x32xf32>
    %cst_25 = arith.constant dense<0.000000e+00> : vector<8x32xf32>
    %22 = tpu.matmul %1, %21, %cst_25 {dimension_numbers = #tpu.dot_dimension_numbers<[1], [0], [0], [1], [0, 0, 1, 1], [], []>} : vector<8x32xf32>, vector<32x32xf32>, vector<8x32xf32> -> vector<8x32xf32>
    %c0_26 = arith.constant 0 : index
    %c3_27 = arith.constant 3 : index
    %c0_28 = arith.constant 0 : index
    %c0_29 = arith.constant 0 : index
    %23 = vector.load %arg5[%c0_26, %c3_27, %c0_28, %c0_29] : memref<2x4x8x32xf32, #tpu.memory_space<vmem>>, vector<1x1x8x32xf32>
    %24 = vector.shape_cast %23 : vector<1x1x8x32xf32> to vector<8x32xf32>
    %25 = vector.shape_cast %22 : vector<8x32xf32> to vector<1x1x8x32xf32>
    tpu.vector_store %arg5[%c0_26, %c3_27, %c0_28, %c0_29], %25 {strides = array<i32>} : memref<2x4x8x32xf32, #tpu.memory_space<vmem>>, vector<1x1x8x32xf32>,
    %c1_30 = arith.constant 1 : index
    %c0_31 = arith.constant 0 : index
    %c0_32 = arith.constant 0 : index
    %26 = vector.load %arg3[%c1_30, %c0_31, %c0_32] : memref<2x8x32xf32, #tpu.memory_space<vmem>>, vector<1x8x32xf32>
    %27 = vector.shape_cast %26 : vector<1x8x32xf32> to vector<8x32xf32>
    %c0_33 = arith.constant 0 : index
    %c0_34 = arith.constant 0 : index
    %c0_35 = arith.constant 0 : index
    %28 = vector.load %arg4[%c0_33, %c0_34, %c0_35] : memref<4x32x32xf32, #tpu.memory_space<vmem>>, vector<1x32x32xf32>
    %29 = vector.shape_cast %28 : vector<1x32x32xf32> to vector<32x32xf32>
    %cst_36 = arith.constant dense<0.000000e+00> : vector<8x32xf32>
    %30 = tpu.matmul %27, %29, %cst_36 {dimension_numbers = #tpu.dot_dimension_numbers<[1], [0], [0], [1], [0, 0, 1, 1], [], []>} : vector<8x32xf32>, vector<32x32xf32>, vector<8x32xf32> -> vector<8x32xf32>
    %c1_37 = arith.constant 1 : index
    %c0_38 = arith.constant 0 : index
    %c0_39 = arith.constant 0 : index
    %c0_40 = arith.constant 0 : index
    %31 = vector.load %arg5[%c1_37, %c0_38, %c0_39, %c0_40] : memref<2x4x8x32xf32, #tpu.memory_space<vmem>>, vector<1x1x8x32xf32>
    %32 = vector.shape_cast %31 : vector<1x1x8x32xf32> to vector<8x32xf32>
    %33 = vector.shape_cast %30 : vector<8x32xf32> to vector<1x1x8x32xf32>
    tpu.vector_store %arg5[%c1_37, %c0_38, %c0_39, %c0_40], %33 {strides = array<i32>} : memref<2x4x8x32xf32, #tpu.memory_space<vmem>>, vector<1x1x8x32xf32>,
    %c1_41 = arith.constant 1 : index
    %c0_42 = arith.constant 0 : index
    %c0_43 = arith.constant 0 : index
    %34 = vector.load %arg4[%c1_41, %c0_42, %c0_43] : memref<4x32x32xf32, #tpu.memory_space<vmem>>, vector<1x32x32xf32>
    %35 = vector.shape_cast %34 : vector<1x32x32xf32> to vector<32x32xf32>
    %cst_44 = arith.constant dense<0.000000e+00> : vector<8x32xf32>
    %36 = tpu.matmul %27, %35, %cst_44 {dimension_numbers = #tpu.dot_dimension_numbers<[1], [0], [0], [1], [0, 0, 1, 1], [], []>} : vector<8x32xf32>, vector<32x32xf32>, vector<8x32xf32> -> vector<8x32xf32>
    %c1_45 = arith.constant 1 : index
    %c1_46 = arith.constant 1 : index
    %c0_47 = arith.constant 0 : index
    %c0_48 = arith.constant 0 : index
    %37 = vector.load %arg5[%c1_45, %c1_46, %c0_47, %c0_48] : memref<2x4x8x32xf32, #tpu.memory_space<vmem>>, vector<1x1x8x32xf32>
    %38 = vector.shape_cast %37 : vector<1x1x8x32xf32> to vector<8x32xf32>
    %39 = vector.shape_cast %36 : vector<8x32xf32> to vector<1x1x8x32xf32>
    tpu.vector_store %arg5[%c1_45, %c1_46, %c0_47, %c0_48], %39 {strides = array<i32>} : memref<2x4x8x32xf32, #tpu.memory_space<vmem>>, vector<1x1x8x32xf32>,
    %c2_49 = arith.constant 2 : index
    %c0_50 = arith.constant 0 : index
    %c0_51 = arith.constant 0 : index
    %40 = vector.load %arg4[%c2_49, %c0_50, %c0_51] : memref<4x32x32xf32, #tpu.memory_space<vmem>>, vector<1x32x32xf32>
    %41 = vector.shape_cast %40 : vector<1x32x32xf32> to vector<32x32xf32>
    %cst_52 = arith.constant dense<0.000000e+00> : vector<8x32xf32>
    %42 = tpu.matmul %27, %41, %cst_52 {dimension_numbers = #tpu.dot_dimension_numbers<[1], [0], [0], [1], [0, 0, 1, 1], [], []>} : vector<8x32xf32>, vector<32x32xf32>, vector<8x32xf32> -> vector<8x32xf32>
    %c1_53 = arith.constant 1 : index
    %c2_54 = arith.constant 2 : index
    %c0_55 = arith.constant 0 : index
    %c0_56 = arith.constant 0 : index
    %43 = vector.load %arg5[%c1_53, %c2_54, %c0_55, %c0_56] : memref<2x4x8x32xf32, #tpu.memory_space<vmem>>, vector<1x1x8x32xf32>
    %44 = vector.shape_cast %43 : vector<1x1x8x32xf32> to vector<8x32xf32>
    %45 = vector.shape_cast %42 : vector<8x32xf32> to vector<1x1x8x32xf32>
    tpu.vector_store %arg5[%c1_53, %c2_54, %c0_55, %c0_56], %45 {strides = array<i32>} : memref<2x4x8x32xf32, #tpu.memory_space<vmem>>, vector<1x1x8x32xf32>,
    %c3_57 = arith.constant 3 : index
    %c0_58 = arith.constant 0 : index
    %c0_59 = arith.constant 0 : index
    %46 = vector.load %arg4[%c3_57, %c0_58, %c0_59] : memref<4x32x32xf32, #tpu.memory_space<vmem>>, vector<1x32x32xf32>
    %47 = vector.shape_cast %46 : vector<1x32x32xf32> to vector<32x32xf32>
    %cst_60 = arith.constant dense<0.000000e+00> : vector<8x32xf32>
    %48 = tpu.matmul %27, %47, %cst_60 {dimension_numbers = #tpu.dot_dimension_numbers<[1], [0], [0], [1], [0, 0, 1, 1], [], []>} : vector<8x32xf32>, vector<32x32xf32>, vector<8x32xf32> -> vector<8x32xf32>
    %c1_61 = arith.constant 1 : index
    %c3_62 = arith.constant 3 : index
    %c0_63 = arith.constant 0 : index
    %c0_64 = arith.constant 0 : index
    %49 = vector.load %arg5[%c1_61, %c3_62, %c0_63, %c0_64] : memref<2x4x8x32xf32, #tpu.memory_space<vmem>>, vector<1x1x8x32xf32>
    %50 = vector.shape_cast %49 : vector<1x1x8x32xf32> to vector<8x32xf32>
    %51 = vector.shape_cast %48 : vector<8x32xf32> to vector<1x1x8x32xf32>
    tpu.vector_store %arg5[%c1_61, %c3_62, %c0_63, %c0_64], %51 {strides = array<i32>} : memref<2x4x8x32xf32, #tpu.memory_space<vmem>>, vector<1x1x8x32xf32>,
    return
  }
  func.func @transform_0(%arg0: i32, %arg1: i32, %arg2: i32) -> (i32, i32, i32) {
    %c0_i32 = arith.constant 0 : i32
    %c0_i32_0 = arith.constant 0 : i32
    return %arg1, %arg2, %c0_i32 : i32, i32, i32
  }
  func.func @transform_1(%arg0: i32, %arg1: i32, %arg2: i32) -> (i32, i32, i32) {
    %c0_i32 = arith.constant 0 : i32
    %c0_i32_0 = arith.constant 0 : i32
    %c0_i32_1 = arith.constant 0 : i32
    return %arg0, %c0_i32, %c0_i32_0 : i32, i32, i32
  }
  func.func @transform_2(%arg0: i32, %arg1: i32, %arg2: i32) -> (i32, i32, i32, i32) {
    %c0_i32 = arith.constant 0 : i32
    %c0_i32_0 = arith.constant 0 : i32
    return %arg1, %arg0, %arg2, %c0_i32 : i32, i32, i32, i32
  }
}

module attributes {stable_mosaic.version = 11 : i64} {
  func.func @_multicg_kernel(%arg0: i32, %arg1: i32, %arg2: i32, %arg3: memref<2x8x32xf32, #tpu.memory_space<vmem>>, %arg4: memref<4x32x32xf32, #tpu.memory_space<vmem>>, %arg5: memref<2x4x8x32xf32, #tpu.memory_space<vmem>>) attributes {dimension_semantics = [#tpu.dimension_semantics<parallel>, #tpu.dimension_semantics<parallel>, #tpu.dimension_semantics<parallel>], iteration_bounds = array<i64: 1, 1, 1>, scalar_prefetch = 0 : i64, scratch_operands = 0 : i64, tpu.core_type = #tpu.core_type<tc>, window_params = [{transform_indices = @transform_0, window_bounds = array<i64: 2, 8, 32>}, {transform_indices = @transform_1, window_bounds = array<i64: 4, 32, 32>}, {transform_indices = @transform_2, window_bounds = array<i64: 2, 4, 8, 32>}]} {
    %c0 = arith.constant 0 : index
    %c0_0 = arith.constant 0 : index
    %c0_1 = arith.constant 0 : index
    %0 = vector.load %arg3[%c0, %c0_0, %c0_1] : memref<2x8x32xf32, #tpu.memory_space<vmem>>, vector<1x8x32xf32>
    %1 = vector.shape_cast %0 : vector<1x8x32xf32> to vector<8x32xf32>
    %c0_2 = arith.constant 0 : index
    %c0_3 = arith.constant 0 : index
    %c0_4 = arith.constant 0 : index
    %2 = vector.load %arg4[%c0_2, %c0_3, %c0_4] : memref<4x32x32xf32, #tpu.memory_space<vmem>>, vector<1x32x32xf32>
    %3 = vector.shape_cast %2 : vector<1x32x32xf32> to vector<32x32xf32>
    %cst = arith.constant dense<0.000000e+00> : vector<8x32xf32>
    %4 = tpu.matmul %1, %3, %cst {dimension_numbers = #tpu.dot_dimension_numbers<[1], [0], [0], [1], [0, 0, 1, 1], [], []>} : vector<8x32xf32>, vector<32x32xf32>, vector<8x32xf32> -> vector<8x32xf32>
    %c0_5 = arith.constant 0 : index
    %c0_6 = arith.constant 0 : index
    %c0_7 = arith.constant 0 : index
    %c0_8 = arith.constant 0 : index
    %5 = vector.load %arg5[%c0_5, %c0_6, %c0_7, %c0_8] : memref<2x4x8x32xf32, #tpu.memory_space<vmem>>, vector<1x1x8x32xf32>
    %6 = vector.shape_cast %5 : vector<1x1x8x32xf32> to vector<8x32xf32>
    %7 = vector.shape_cast %4 : vector<8x32xf32> to vector<1x1x8x32xf32>
    tpu.vector_store %arg5[%c0_5, %c0_6, %c0_7, %c0_8], %7 {strides = array<i32>} : memref<2x4x8x32xf32, #tpu.memory_space<vmem>>, vector<1x1x8x32xf32>,
    %c1 = arith.constant 1 : index
    %c0_9 = arith.constant 0 : index
    %c0_10 = arith.constant 0 : index
    %8 = vector.load %arg4[%c1, %c0_9, %c0_10] : memref<4x32x32xf32, #tpu.memory_space<vmem>>, vector<1x32x32xf32>
    %9 = vector.shape_cast %8 : vector<1x32x32xf32> to vector<32x32xf32>
    %cst_11 = arith.constant dense<0.000000e+00> : vector<8x32xf32>
    %10 = tpu.matmul %1, %9, %cst_11 {dimension_numbers = #tpu.dot_dimension_numbers<[1], [0], [0], [1], [0, 0, 1, 1], [], []>} : vector<8x32xf32>, vector<32x32xf32>, vector<8x32xf32> -> vector<8x32xf32>
    %c0_12 = arith.constant 0 : index
    %c1_13 = arith.constant 1 : index
    %c0_14 = arith.constant 0 : index
    %c0_15 = arith.constant 0 : index
    %11 = vector.load %arg5[%c0_12, %c1_13, %c0_14, %c0_15] : memref<2x4x8x32xf32, #tpu.memory_space<vmem>>, vector<1x1x8x32xf32>
    %12 = vector.shape_cast %11 : vector<1x1x8x32xf32> to vector<8x32xf32>
    %13 = vector.shape_cast %10 : vector<8x32xf32> to vector<1x1x8x32xf32>
    tpu.vector_store %arg5[%c0_12, %c1_13, %c0_14, %c0_15], %13 {strides = array<i32>} : memref<2x4x8x32xf32, #tpu.memory_space<vmem>>, vector<1x1x8x32xf32>,
    %c2 = arith.constant 2 : index
    %c0_16 = arith.constant 0 : index
    %c0_17 = arith.constant 0 : index
    %14 = vector.load %arg4[%c2, %c0_16, %c0_17] : memref<4x32x32xf32, #tpu.memory_space<vmem>>, vector<1x32x32xf32>
    %15 = vector.shape_cast %14 : vector<1x32x32xf32> to vector<32x32xf32>
    %cst_18 = arith.constant dense<0.000000e+00> : vector<8x32xf32>
    %16 = tpu.matmul %1, %15, %cst_18 {dimension_numbers = #tpu.dot_dimension_numbers<[1], [0], [0], [1], [0, 0, 1, 1], [], []>} : vector<8x32xf32>, vector<32x32xf32>, vector<8x32xf32> -> vector<8x32xf32>
    %c0_19 = arith.constant 0 : index
    %c2_20 = arith.constant 2 : index
    %c0_21 = arith.constant 0 : index
    %c0_22 = arith.constant 0 : index
    %17 = vector.load %arg5[%c0_19, %c2_20, %c0_21, %c0_22] : memref<2x4x8x32xf32, #tpu.memory_space<vmem>>, vector<1x1x8x32xf32>
    %18 = vector.shape_cast %17 : vector<1x1x8x32xf32> to vector<8x32xf32>
    %19 = vector.shape_cast %16 : vector<8x32xf32> to vector<1x1x8x32xf32>
    tpu.vector_store %arg5[%c0_19, %c2_20, %c0_21, %c0_22], %19 {strides = array<i32>} : memref<2x4x8x32xf32, #tpu.memory_space<vmem>>, vector<1x1x8x32xf32>,
    %c3 = arith.constant 3 : index
    %c0_23 = arith.constant 0 : index
    %c0_24 = arith.constant 0 : index
    %20 = vector.load %arg4[%c3, %c0_23, %c0_24] : memref<4x32x32xf32, #tpu.memory_space<vmem>>, vector<1x32x32xf32>
    %21 = vector.shape_cast %20 : vector<1x32x32xf32> to vector<32x32xf32>
    %cst_25 = arith.constant dense<0.000000e+00> : vector<8x32xf32>
    %22 = tpu.matmul %1, %21, %cst_25 {dimension_numbers = #tpu.dot_dimension_numbers<[1], [0], [0], [1], [0, 0, 1, 1], [], []>} : vector<8x32xf32>, vector<32x32xf32>, vector<8x32xf32> -> vector<8x32xf32>
    %c0_26 = arith.constant 0 : index
    %c3_27 = arith.constant 3 : index
    %c0_28 = arith.constant 0 : index
    %c0_29 = arith.constant 0 : index
    %23 = vector.load %arg5[%c0_26, %c3_27, %c0_28, %c0_29] : memref<2x4x8x32xf32, #tpu.memory_space<vmem>>, vector<1x1x8x32xf32>
    %24 = vector.shape_cast %23 : vector<1x1x8x32xf32> to vector<8x32xf32>
    %25 = vector.shape_cast %22 : vector<8x32xf32> to vector<1x1x8x32xf32>
    tpu.vector_store %arg5[%c0_26, %c3_27, %c0_28, %c0_29], %25 {strides = array<i32>} : memref<2x4x8x32xf32, #tpu.memory_space<vmem>>, vector<1x1x8x32xf32>,
    %c1_30 = arith.constant 1 : index
    %c0_31 = arith.constant 0 : index
    %c0_32 = arith.constant 0 : index
    %26 = vector.load %arg3[%c1_30, %c0_31, %c0_32] : memref<2x8x32xf32, #tpu.memory_space<vmem>>, vector<1x8x32xf32>
    %27 = vector.shape_cast %26 : vector<1x8x32xf32> to vector<8x32xf32>
    %c0_33 = arith.constant 0 : index
    %c0_34 = arith.constant 0 : index
    %c0_35 = arith.constant 0 : index
    %28 = vector.load %arg4[%c0_33, %c0_34, %c0_35] : memref<4x32x32xf32, #tpu.memory_space<vmem>>, vector<1x32x32xf32>
    %29 = vector.shape_cast %28 : vector<1x32x32xf32> to vector<32x32xf32>
    %cst_36 = arith.constant dense<0.000000e+00> : vector<8x32xf32>
    %30 = tpu.matmul %27, %29, %cst_36 {dimension_numbers = #tpu.dot_dimension_numbers<[1], [0], [0], [1], [0, 0, 1, 1], [], []>} : vector<8x32xf32>, vector<32x32xf32>, vector<8x32xf32> -> vector<8x32xf32>
    %c1_37 = arith.constant 1 : index
    %c0_38 = arith.constant 0 : index
    %c0_39 = arith.constant 0 : index
    %c0_40 = arith.constant 0 : index
    %31 = vector.load %arg5[%c1_37, %c0_38, %c0_39, %c0_40] : memref<2x4x8x32xf32, #tpu.memory_space<vmem>>, vector<1x1x8x32xf32>
    %32 = vector.shape_cast %31 : vector<1x1x8x32xf32> to vector<8x32xf32>
    %33 = vector.shape_cast %30 : vector<8x32xf32> to vector<1x1x8x32xf32>
    tpu.vector_store %arg5[%c1_37, %c0_38, %c0_39, %c0_40], %33 {strides = array<i32>} : memref<2x4x8x32xf32, #tpu.memory_space<vmem>>, vector<1x1x8x32xf32>,
    %c1_41 = arith.constant 1 : index
    %c0_42 = arith.constant 0 : index
    %c0_43 = arith.constant 0 : index
    %34 = vector.load %arg4[%c1_41, %c0_42, %c0_43] : memref<4x32x32xf32, #tpu.memory_space<vmem>>, vector<1x32x32xf32>
    %35 = vector.shape_cast %34 : vector<1x32x32xf32> to vector<32x32xf32>
    %cst_44 = arith.constant dense<0.000000e+00> : vector<8x32xf32>
    %36 = tpu.matmul %27, %35, %cst_44 {dimension_numbers = #tpu.dot_dimension_numbers<[1], [0], [0], [1], [0, 0, 1, 1], [], []>} : vector<8x32xf32>, vector<32x32xf32>, vector<8x32xf32> -> vector<8x32xf32>
    %c1_45 = arith.constant 1 : index
    %c1_46 = arith.constant 1 : index
    %c0_47 = arith.constant 0 : index
    %c0_48 = arith.constant 0 : index
    %37 = vector.load %arg5[%c1_45, %c1_46, %c0_47, %c0_48] : memref<2x4x8x32xf32, #tpu.memory_space<vmem>>, vector<1x1x8x32xf32>
    %38 = vector.shape_cast %37 : vector<1x1x8x32xf32> to vector<8x32xf32>
    %39 = vector.shape_cast %36 : vector<8x32xf32> to vector<1x1x8x32xf32>
    tpu.vector_store %arg5[%c1_45, %c1_46, %c0_47, %c0_48], %39 {strides = array<i32>} : memref<2x4x8x32xf32, #tpu.memory_space<vmem>>, vector<1x1x8x32xf32>,
    %c2_49 = arith.constant 2 : index
    %c0_50 = arith.constant 0 : index
    %c0_51 = arith.constant 0 : index
    %40 = vector.load %arg4[%c2_49, %c0_50, %c0_51] : memref<4x32x32xf32, #tpu.memory_space<vmem>>, vector<1x32x32xf32>
    %41 = vector.shape_cast %40 : vector<1x32x32xf32> to vector<32x32xf32>
    %cst_52 = arith.constant dense<0.000000e+00> : vector<8x32xf32>
    %42 = tpu.matmul %27, %41, %cst_52 {dimension_numbers = #tpu.dot_dimension_numbers<[1], [0], [0], [1], [0, 0, 1, 1], [], []>} : vector<8x32xf32>, vector<32x32xf32>, vector<8x32xf32> -> vector<8x32xf32>
    %c1_53 = arith.constant 1 : index
    %c2_54 = arith.constant 2 : index
    %c0_55 = arith.constant 0 : index
    %c0_56 = arith.constant 0 : index
    %43 = vector.load %arg5[%c1_53, %c2_54, %c0_55, %c0_56] : memref<2x4x8x32xf32, #tpu.memory_space<vmem>>, vector<1x1x8x32xf32>
    %44 = vector.shape_cast %43 : vector<1x1x8x32xf32> to vector<8x32xf32>
    %45 = vector.shape_cast %42 : vector<8x32xf32> to vector<1x1x8x32xf32>
    tpu.vector_store %arg5[%c1_53, %c2_54, %c0_55, %c0_56], %45 {strides = array<i32>} : memref<2x4x8x32xf32, #tpu.memory_space<vmem>>, vector<1x1x8x32xf32>,
    %c3_57 = arith.constant 3 : index
    %c0_58 = arith.constant 0 : index
    %c0_59 = arith.constant 0 : index
    %46 = vector.load %arg4[%c3_57, %c0_58, %c0_59] : memref<4x32x32xf32, #tpu.memory_space<vmem>>, vector<1x32x32xf32>
    %47 = vector.shape_cast %46 : vector<1x32x32xf32> to vector<32x32xf32>
    %cst_60 = arith.constant dense<0.000000e+00> : vector<8x32xf32>
    %48 = tpu.matmul %27, %47, %cst_60 {dimension_numbers = #tpu.dot_dimension_numbers<[1], [0], [0], [1], [0, 0, 1, 1], [], []>} : vector<8x32xf32>, vector<32x32xf32>, vector<8x32xf32> -> vector<8x32xf32>
    %c1_61 = arith.constant 1 : index
    %c3_62 = arith.constant 3 : index
    %c0_63 = arith.constant 0 : index
    %c0_64 = arith.constant 0 : index
    %49 = vector.load %arg5[%c1_61, %c3_62, %c0_63, %c0_64] : memref<2x4x8x32xf32, #tpu.memory_space<vmem>>, vector<1x1x8x32xf32>
    %50 = vector.shape_cast %49 : vector<1x1x8x32xf32> to vector<8x32xf32>
    %51 = vector.shape_cast %48 : vector<8x32xf32> to vector<1x1x8x32xf32>
    tpu.vector_store %arg5[%c1_61, %c3_62, %c0_63, %c0_64], %51 {strides = array<i32>} : memref<2x4x8x32xf32, #tpu.memory_space<vmem>>, vector<1x1x8x32xf32>,
    return
  }
  func.func @transform_0(%arg0: i32, %arg1: i32, %arg2: i32) -> (i32, i32, i32) {
    %c0_i32 = arith.constant 0 : i32
    %c0_i32_0 = arith.constant 0 : i32
    return %arg1, %arg2, %c0_i32 : i32, i32, i32
  }
  func.func @transform_1(%arg0: i32, %arg1: i32, %arg2: i32) -> (i32, i32, i32) {
    %c0_i32 = arith.constant 0 : i32
    %c0_i32_0 = arith.constant 0 : i32
    %c0_i32_1 = arith.constant 0 : i32
    return %arg0, %c0_i32, %c0_i32_0 : i32, i32, i32
  }
  func.func @transform_2(%arg0: i32, %arg1: i32, %arg2: i32) -> (i32, i32, i32, i32) {
    %c0_i32 = arith.constant 0 : i32
    %c0_i32_0 = arith.constant 0 : i32
    return %arg1, %arg0, %arg2, %c0_i32 : i32, i32, i32, i32
  }
}

</mosaic_0001>

<llo_original>
// kernel: tpu_custom_call.1
$region0: #{tpu_custom_call.1}
  #allocation0 [shape = 'u32[]', space=smem, size = 0x4, offset = 0x4, fixed_abs, tag = 'smem constant byte address 0x4 - core index']
  #allocation1 [shape = 'u32[144,128]{1,0:T(1,128)}', space=vmem, size = 0x12000, scoped, tag = 'internal scratch']
  %s0 = inlined_call_operand.hbm [shape: f32[2,8,32], index: 0, kind: input, shape index: {}]
  %s1 = inlined_call_operand.hbm [shape: f32[4,32,32], index: 1, kind: input, shape index: {}]
  %s2 = inlined_call_operand.hbm [shape: f32[2,4,8,32], index: 2, kind: output, shape index: {}]
  %s3 = sld [smem:[#allocation0]]
  $region26: #{tpu_custom_call.1} parent=0
    _
  %s5 = ssub.s32 1, %s3
  %s6 = scalar_select 0, %s5, %s3
  $region1: #{tpu_custom_call.1} parent=0
    #allocation2 [shape = 'u8[8192]{0}', space=vmem, size = 0x2000, scoped, tag = 'input window, operand 0, single buffered']
    #allocation3 [shape = 's32[1]{0}', space=sflag, size = 0x4, scoped, tag = 'scoped memory for tpu_custom_call.1']
    #allocation4 [shape = 's32[1]{0}', space=sflag, size = 0x4, scoped, tag = 'scoped memory for tpu_custom_call.1']
    #allocation5 [shape = 'u8[65536]{0}', space=vmem, size = 0x10000, scoped, tag = 'input window, operand 1, single buffered']
    #allocation6 [shape = 's32[1]{0}', space=sflag, size = 0x4, scoped, tag = 'scoped memory for tpu_custom_call.1']
    #allocation7 [shape = 'u8[32768]{0}', space=vmem, size = 0x8000, scoped, tag = 'output window, operand 0, single buffered']
    %7 = vsyncpa [#allocation3], 0
    %8 = vsyncpa [#allocation6], 0
    %9 = vsyncpa [#allocation4], 0
    // Predicated region
    $region2: #{tpu_custom_call.1} parent=1 // pred_check
      _
    $region3: #{tpu_custom_call.1} parent=1 // pred_check_branch
      %11 = sbr.rel (0) target = $region5
    $region4: #{tpu_custom_call.1} parent=1 // pred_region
      %s13 = ssub.s32 256, 256
      %14 = vsyncadd [#allocation3], %s13
      %s15 = sshll.u32 [#allocation2], 4
      %s16 = int_to_ptr.vmem [resolvable:$true] %s15
      %21 = dma.hbm_to_vmem [thread:$0]  %s0, 256, %s16, [#allocation3], 128, 128, 8
    $region5: #{tpu_custom_call.1} parent=1 // pred_fallthru
      _
    // Predicated region
    $region6: #{tpu_custom_call.1} parent=1 // pred_check
      _
    $region7: #{tpu_custom_call.1} parent=1 // pred_check_branch
      %23 = sbr.rel (0) target = $region9
    $region8: #{tpu_custom_call.1} parent=1 // pred_region
      %s25 = ssub.s32 2048, 2048
      %26 = vsyncadd [#allocation6], %s25
      %s27 = sshll.u32 [#allocation5], 4
      %s28 = int_to_ptr.vmem [resolvable:$true] %s27
      %33 = dma.hbm_to_vmem [thread:$0]  %s1, 2048, %s28, [#allocation6], 128, 128, 8
    $region9: #{tpu_custom_call.1} parent=1 // pred_fallthru
      _
    // Predicated region
    $region10: #{tpu_custom_call.1} parent=1 // pred_check
      _
    $region11: #{tpu_custom_call.1} parent=1 // pred_check_branch
      %35 = sbr.rel (0) target = $region13
    $region12: #{tpu_custom_call.1} parent=1 // pred_region
      %36 = dma.done [#allocation3], 256
    $region13: #{tpu_custom_call.1} parent=1 // pred_fallthru
      _
    // Predicated region
    $region14: #{tpu_custom_call.1} parent=1 // pred_check
      _
    $region15: #{tpu_custom_call.1} parent=1 // pred_check_branch
      %38 = sbr.rel (0) target = $region17
    $region16: #{tpu_custom_call.1} parent=1 // pred_region
      %39 = dma.done [#allocation6], 2048
    $region17: #{tpu_custom_call.1} parent=1 // pred_fallthru
      _
    %v40 = vld [vmem:[#allocation2] sm:$0xff]
    %v41 = vld [vmem:[#allocation5] sm:$0xff]
    %v42 = vld [vmem:[#allocation5 + $0x8] sm:$0xff]
    %v43 = vld [vmem:[#allocation5 + $0x10] sm:$0xff]
    %v44 = vld [vmem:[#allocation5 + $0x18] sm:$0xff]
    %vm45 = vcmask 261120
    %v47 = vsel %vm45, %v40, 0
    %49 = vmatprep.subr.mxu0 0.0
    %50 = vmatpush1.msra.mxu0 0.0
    %51 = vmatprep.subr.mxu0 0.0
    %52 = vmatpush1.msra.mxu0 0.0
    %53 = vmatprep.subr.mxu0 0.0
    %54 = vmatpush1.msra.mxu0 0.0
    %55 = vmatprep.subr.mxu0 0.0
    %56 = vmatpush1.msra.mxu0 0.0
    %57 = vmatprep.subr.mxu0 0.0
    %58 = vmatpush1.msra.mxu0 0.0
    %59 = vmatprep.subr.mxu0 0.0
    %60 = vmatpush1.msra.mxu0 0.0
    %61 = vmatprep.subr.mxu0 0.0
    %62 = vmatpush1.msra.mxu0 0.0
    %63 = vmatprep.subr.mxu0 0.0
    %64 = vmatpush1.msra.mxu0 0.0
    %65 = vmatprep.subr.mxu0 0.0
    %66 = vmatpush1.msra.mxu0 0.0
    %67 = vmatprep.subr.mxu0 0.0
    %68 = vmatpush1.msra.mxu0 0.0
    %69 = vmatprep.subr.mxu0 0.0
    %70 = vmatpush1.msra.mxu0 0.0
    %71 = vmatprep.subr.mxu0 0.0
    %72 = vmatpush1.msra.mxu0 0.0
    %73 = vmatprep.subr.mxu0 0.0
    %74 = vmatpush1.msra.mxu0 %v44
    %75 = vmatprep.subr.mxu0 0.0
    %76 = vmatpush1.msra.mxu0 %v43
    %77 = vmatprep.subr.mxu0 0.0
    %78 = vmatpush1.msra.mxu0 %v42
    %79 = vmatprep.subr.mxu0 0.0
    %80 = vmatpush1.msra.mxu0 %v41
    %81 = vmatprep.subr.mxu0 0.0
    %82 = vmatpush2.msra.mxu0 0.0
    %83 = vmatprep.subr.mxu0 0.0
    %84 = vmatpush2.msra.mxu0 0.0
    %85 = vmatprep.subr.mxu0 0.0
    %86 = vmatpush2.msra.mxu0 0.0
    %87 = vmatprep.subr.mxu0 0.0
    %88 = vmatpush2.msra.mxu0 0.0
    %89 = vmatprep.subr.mxu0 0.0
    %90 = vmatpush2.msra.mxu0 0.0
    %91 = vmatprep.subr.mxu0 0.0
    %92 = vmatpush2.msra.mxu0 0.0
    %93 = vmatprep.subr.mxu0 0.0
    %94 = vmatpush2.msra.mxu0 0.0
    %95 = vmatprep.subr.mxu0 0.0
    %96 = vmatpush2.msra.mxu0 0.0
    %97 = vmatprep.subr.mxu0 0.0
    %98 = vmatpush2.msra.mxu0 0.0
    %99 = vmatprep.subr.mxu0 0.0
    %100 = vmatpush2.msra.mxu0 0.0
    %101 = vmatprep.subr.mxu0 0.0
    %102 = vmatpush2.msra.mxu0 0.0
    %103 = vmatprep.subr.mxu0 0.0
    %104 = vmatpush2.msra.mxu0 0.0
    %105 = vmatprep.subr.mxu0 0.0
    %106 = vmatpush2.msra.mxu0 0.0
    %107 = vmatprep.subr.mxu0 0.0
    %108 = vmatpush2.msra.mxu0 0.0
    %109 = vmatprep.subr.mxu0 0.0
    %110 = vmatpush2.msra.mxu0 0.0
    %111 = vmatprep.subr.mxu0 0.0
    %112 = vmatpush2.msra.mxu0 0.0
    %113 = vmatprep.mubr.f32.mxu0 0.0
    %114 = vmatmul.mubr.f32.gmra.mxu0 %v47
    %v115 = vpop.f32.mrf.mxu0
    %v116 = vadd.f32 0.0, %v115
    %v117 = vpop.f32.mrf.mxu0
    %118 = vdwg.mxu0
    %119 = vst.msk [vmem:[#allocation7] sm:$0xff] %vm45, %v116
    %s120 = scalar_lea.vmem [#allocation5], 32
    %v121 = vld [vmem:[%s120] sm:$0xff]
    %v122 = vld [vmem:[%s120 + $0x8] sm:$0xff]
    %v123 = vld [vmem:[%s120 + $0x10] sm:$0xff]
    %v124 = vld [vmem:[%s120 + $0x18] sm:$0xff]
    %125 = vmatprep.subr.mxu0 0.0
    %126 = vmatpush1.msra.mxu0 0.0
    %127 = vmatprep.subr.mxu0 0.0
    %128 = vmatpush1.msra.mxu0 0.0
    %129 = vmatprep.subr.mxu0 0.0
    %130 = vmatpush1.msra.mxu0 0.0
    %131 = vmatprep.subr.mxu0 0.0
    %132 = vmatpush1.msra.mxu0 0.0
    %133 = vmatprep.subr.mxu0 0.0
    %134 = vmatpush1.msra.mxu0 0.0
    %135 = vmatprep.subr.mxu0 0.0
    %136 = vmatpush1.msra.mxu0 0.0
    %137 = vmatprep.subr.mxu0 0.0
    %138 = vmatpush1.msra.mxu0 0.0
    %139 = vmatprep.subr.mxu0 0.0
    %140 = vmatpush1.msra.mxu0 0.0
    %141 = vmatprep.subr.mxu0 0.0
    %142 = vmatpush1.msra.mxu0 0.0
    %143 = vmatprep.subr.mxu0 0.0
    %144 = vmatpush1.msra.mxu0 0.0
    %145 = vmatprep.subr.mxu0 0.0
    %146 = vmatpush1.msra.mxu0 0.0
    %147 = vmatprep.subr.mxu0 0.0
    %148 = vmatpush1.msra.mxu0 0.0
    %149 = vmatprep.subr.mxu0 0.0
    %150 = vmatpush1.msra.mxu0 %v124
    %151 = vmatprep.subr.mxu0 0.0
    %152 = vmatpush1.msra.mxu0 %v123
    %153 = vmatprep.subr.mxu0 0.0
    %154 = vmatpush1.msra.mxu0 %v122
    %155 = vmatprep.subr.mxu0 0.0
    %156 = vmatpush1.msra.mxu0 %v121
    %157 = vmatprep.subr.mxu0 0.0
    %158 = vmatpush2.msra.mxu0 0.0
    %159 = vmatprep.subr.mxu0 0.0
    %160 = vmatpush2.msra.mxu0 0.0
    %161 = vmatprep.subr.mxu0 0.0
    %162 = vmatpush2.msra.mxu0 0.0
    %163 = vmatprep.subr.mxu0 0.0
    %164 = vmatpush2.msra.mxu0 0.0
    %165 = vmatprep.subr.mxu0 0.0
    %166 = vmatpush2.msra.mxu0 0.0
    %167 = vmatprep.subr.mxu0 0.0
    %168 = vmatpush2.msra.mxu0 0.0
    %169 = vmatprep.subr.mxu0 0.0
    %170 = vmatpush2.msra.mxu0 0.0
    %171 = vmatprep.subr.mxu0 0.0
    %172 = vmatpush2.msra.mxu0 0.0
    %173 = vmatprep.subr.mxu0 0.0
    %174 = vmatpush2.msra.mxu0 0.0
    %175 = vmatprep.subr.mxu0 0.0
    %176 = vmatpush2.msra.mxu0 0.0
    %177 = vmatprep.subr.mxu0 0.0
    %178 = vmatpush2.msra.mxu0 0.0
    %179 = vmatprep.subr.mxu0 0.0
    %180 = vmatpush2.msra.mxu0 0.0
    %181 = vmatprep.subr.mxu0 0.0
    %182 = vmatpush2.msra.mxu0 0.0
    %183 = vmatprep.subr.mxu0 0.0
    %184 = vmatpush2.msra.mxu0 0.0
    %185 = vmatprep.subr.mxu0 0.0
    %186 = vmatpush2.msra.mxu0 0.0
    %187 = vmatprep.subr.mxu0 0.0
    %188 = vmatpush2.msra.mxu0 0.0
    %189 = vmatprep.mubr.f32.mxu0 0.0
    %190 = vmatmul.mubr.f32.gmra.mxu0 %v47
    %v191 = vpop.f32.mrf.mxu0
    %v192 = vadd.f32 0.0, %v191
    %v193 = vpop.f32.mrf.mxu0
    %194 = vdwg.mxu0
    %s195 = scalar_lea.vmem [#allocation7], 8
    %196 = vst.msk [vmem:[%s195] sm:$0xff] %vm45, %v192
    %s197 = scalar_lea.vmem [#allocation5], 64
    %v198 = vld [vmem:[%s197] sm:$0xff]
    %v199 = vld [vmem:[%s197 + $0x8] sm:$0xff]
    %v200 = vld [vmem:[%s197 + $0x10] sm:$0xff]
    %v201 = vld [vmem:[%s197 + $0x18] sm:$0xff]
    %202 = vmatprep.subr.mxu0 0.0
    %203 = vmatpush1.msra.mxu0 0.0
    %204 = vmatprep.subr.mxu0 0.0
    %205 = vmatpush1.msra.mxu0 0.0
    %206 = vmatprep.subr.mxu0 0.0
    %207 = vmatpush1.msra.mxu0 0.0
    %208 = vmatprep.subr.mxu0 0.0
    %209 = vmatpush1.msra.mxu0 0.0
    %210 = vmatprep.subr.mxu0 0.0
    %211 = vmatpush1.msra.mxu0 0.0
    %212 = vmatprep.subr.mxu0 0.0
    %213 = vmatpush1.msra.mxu0 0.0
    %214 = vmatprep.subr.mxu0 0.0
    %215 = vmatpush1.msra.mxu0 0.0
    %216 = vmatprep.subr.mxu0 0.0
    %217 = vmatpush1.msra.mxu0 0.0
    %218 = vmatprep.subr.mxu0 0.0
    %219 = vmatpush1.msra.mxu0 0.0
    %220 = vmatprep.subr.mxu0 0.0
    %221 = vmatpush1.msra.mxu0 0.0
    %222 = vmatprep.subr.mxu0 0.0
    %223 = vmatpush1.msra.mxu0 0.0
    %224 = vmatprep.subr.mxu0 0.0
    %225 = vmatpush1.msra.mxu0 0.0
    %226 = vmatprep.subr.mxu0 0.0
    %227 = vmatpush1.msra.mxu0 %v201
    %228 = vmatprep.subr.mxu0 0.0
    %229 = vmatpush1.msra.mxu0 %v200
    %230 = vmatprep.subr.mxu0 0.0
    %231 = vmatpush1.msra.mxu0 %v199
    %232 = vmatprep.subr.mxu0 0.0
    %233 = vmatpush1.msra.mxu0 %v198
    %234 = vmatprep.subr.mxu0 0.0
    %235 = vmatpush2.msra.mxu0 0.0
    %236 = vmatprep.subr.mxu0 0.0
    %237 = vmatpush2.msra.mxu0 0.0
    %238 = vmatprep.subr.mxu0 0.0
    %239 = vmatpush2.msra.mxu0 0.0
    %240 = vmatprep.subr.mxu0 0.0
    %241 = vmatpush2.msra.mxu0 0.0
    %242 = vmatprep.subr.mxu0 0.0
    %243 = vmatpush2.msra.mxu0 0.0
    %244 = vmatprep.subr.mxu0 0.0
    %245 = vmatpush2.msra.mxu0 0.0
    %246 = vmatprep.subr.mxu0 0.0
    %247 = vmatpush2.msra.mxu0 0.0
    %248 = vmatprep.subr.mxu0 0.0
    %249 = vmatpush2.msra.mxu0 0.0
    %250 = vmatprep.subr.mxu0 0.0
    %251 = vmatpush2.msra.mxu0 0.0
    %252 = vmatprep.subr.mxu0 0.0
    %253 = vmatpush2.msra.mxu0 0.0
    %254 = vmatprep.subr.mxu0 0.0
    %255 = vmatpush2.msra.mxu0 0.0
    %256 = vmatprep.subr.mxu0 0.0
    %257 = vmatpush2.msra.mxu0 0.0
    %258 = vmatprep.subr.mxu0 0.0
    %259 = vmatpush2.msra.mxu0 0.0
    %260 = vmatprep.subr.mxu0 0.0
    %261 = vmatpush2.msra.mxu0 0.0
    %262 = vmatprep.subr.mxu0 0.0
    %263 = vmatpush2.msra.mxu0 0.0
    %264 = vmatprep.subr.mxu0 0.0
    %265 = vmatpush2.msra.mxu0 0.0
    %266 = vmatprep.mubr.f32.mxu0 0.0
    %267 = vmatmul.mubr.f32.gmra.mxu0 %v47
    %v268 = vpop.f32.mrf.mxu0
    %v269 = vadd.f32 0.0, %v268
    %v270 = vpop.f32.mrf.mxu0
    %271 = vdwg.mxu0
    %s272 = scalar_lea.vmem [#allocation7], 16
    %273 = vst.msk [vmem:[%s272] sm:$0xff] %vm45, %v269
    %s274 = scalar_lea.vmem [#allocation5], 96
    %v275 = vld [vmem:[%s274] sm:$0xff]
    %v276 = vld [vmem:[%s274 + $0x8] sm:$0xff]
    %v277 = vld [vmem:[%s274 + $0x10] sm:$0xff]
    %v278 = vld [vmem:[%s274 + $0x18] sm:$0xff]
    %279 = vmatprep.subr.mxu0 0.0
    %280 = vmatpush1.msra.mxu0 0.0
    %281 = vmatprep.subr.mxu0 0.0
    %282 = vmatpush1.msra.mxu0 0.0
    %283 = vmatprep.subr.mxu0 0.0
    %284 = vmatpush1.msra.mxu0 0.0
    %285 = vmatprep.subr.mxu0 0.0
    %286 = vmatpush1.msra.mxu0 0.0
    %287 = vmatprep.subr.mxu0 0.0
    %288 = vmatpush1.msra.mxu0 0.0
    %289 = vmatprep.subr.mxu0 0.0
    %290 = vmatpush1.msra.mxu0 0.0
    %291 = vmatprep.subr.mxu0 0.0
    %292 = vmatpush1.msra.mxu0 0.0
    %293 = vmatprep.subr.mxu0 0.0
    %294 = vmatpush1.msra.mxu0 0.0
    %295 = vmatprep.subr.mxu0 0.0
    %296 = vmatpush1.msra.mxu0 0.0
    %297 = vmatprep.subr.mxu0 0.0
    %298 = vmatpush1.msra.mxu0 0.0
    %299 = vmatprep.subr.mxu0 0.0
    %300 = vmatpush1.msra.mxu0 0.0
    %301 = vmatprep.subr.mxu0 0.0
    %302 = vmatpush1.msra.mxu0 0.0
    %303 = vmatprep.subr.mxu0 0.0
    %304 = vmatpush1.msra.mxu0 %v278
    %305 = vmatprep.subr.mxu0 0.0
    %306 = vmatpush1.msra.mxu0 %v277
    %307 = vmatprep.subr.mxu0 0.0
    %308 = vmatpush1.msra.mxu0 %v276
    %309 = vmatprep.subr.mxu0 0.0
    %310 = vmatpush1.msra.mxu0 %v275
    %311 = vmatprep.subr.mxu0 0.0
    %312 = vmatpush2.msra.mxu0 0.0
    %313 = vmatprep.subr.mxu0 0.0
    %314 = vmatpush2.msra.mxu0 0.0
    %315 = vmatprep.subr.mxu0 0.0
    %316 = vmatpush2.msra.mxu0 0.0
    %317 = vmatprep.subr.mxu0 0.0
    %318 = vmatpush2.msra.mxu0 0.0
    %319 = vmatprep.subr.mxu0 0.0
    %320 = vmatpush2.msra.mxu0 0.0
    %321 = vmatprep.subr.mxu0 0.0
    %322 = vmatpush2.msra.mxu0 0.0
    %323 = vmatprep.subr.mxu0 0.0
    %324 = vmatpush2.msra.mxu0 0.0
    %325 = vmatprep.subr.mxu0 0.0
    %326 = vmatpush2.msra.mxu0 0.0
    %327 = vmatprep.subr.mxu0 0.0
    %328 = vmatpush2.msra.mxu0 0.0
    %329 = vmatprep.subr.mxu0 0.0
    %330 = vmatpush2.msra.mxu0 0.0
    %331 = vmatprep.subr.mxu0 0.0
    %332 = vmatpush2.msra.mxu0 0.0
    %333 = vmatprep.subr.mxu0 0.0
    %334 = vmatpush2.msra.mxu0 0.0
    %335 = vmatprep.subr.mxu0 0.0
    %336 = vmatpush2.msra.mxu0 0.0
    %337 = vmatprep.subr.mxu0 0.0
    %338 = vmatpush2.msra.mxu0 0.0
    %339 = vmatprep.subr.mxu0 0.0
    %340 = vmatpush2.msra.mxu0 0.0
    %341 = vmatprep.subr.mxu0 0.0
    %342 = vmatpush2.msra.mxu0 0.0
    %343 = vmatprep.mubr.f32.mxu0 0.0
    %344 = vmatmul.mubr.f32.gmra.mxu0 %v47
    %v345 = vpop.f32.mrf.mxu0
    %v346 = vadd.f32 0.0, %v345
    %v347 = vpop.f32.mrf.mxu0
    %348 = vdwg.mxu0
    %s349 = scalar_lea.vmem [#allocation7], 24
    %350 = vst.msk [vmem:[%s349] sm:$0xff] %vm45, %v346
    %s351 = scalar_lea.vmem [#allocation2], 8
    %v352 = vld [vmem:[%s351] sm:$0xff]
    %v353 = vld [vmem:[#allocation5] sm:$0xff]
    %v354 = vld [vmem:[#allocation5 + $0x8] sm:$0xff]
    %v355 = vld [vmem:[#allocation5 + $0x10] sm:$0xff]
    %v356 = vld [vmem:[#allocation5 + $0x18] sm:$0xff]
    %v358 = vsel %vm45, %v352, 0
    %360 = vmatprep.subr.mxu0 0.0
    %361 = vmatpush1.msra.mxu0 0.0
    %362 = vmatprep.subr.mxu0 0.0
    %363 = vmatpush1.msra.mxu0 0.0
    %364 = vmatprep.subr.mxu0 0.0
    %365 = vmatpush1.msra.mxu0 0.0
    %366 = vmatprep.subr.mxu0 0.0
    %367 = vmatpush1.msra.mxu0 0.0
    %368 = vmatprep.subr.mxu0 0.0
    %369 = vmatpush1.msra.mxu0 0.0
    %370 = vmatprep.subr.mxu0 0.0
    %371 = vmatpush1.msra.mxu0 0.0
    %372 = vmatprep.subr.mxu0 0.0
    %373 = vmatpush1.msra.mxu0 0.0
    %374 = vmatprep.subr.mxu0 0.0
    %375 = vmatpush1.msra.mxu0 0.0
    %376 = vmatprep.subr.mxu0 0.0
    %377 = vmatpush1.msra.mxu0 0.0
    %378 = vmatprep.subr.mxu0 0.0
    %379 = vmatpush1.msra.mxu0 0.0
    %380 = vmatprep.subr.mxu0 0.0
    %381 = vmatpush1.msra.mxu0 0.0
    %382 = vmatprep.subr.mxu0 0.0
    %383 = vmatpush1.msra.mxu0 0.0
    %384 = vmatprep.subr.mxu0 0.0
    %385 = vmatpush1.msra.mxu0 %v356
    %386 = vmatprep.subr.mxu0 0.0
    %387 = vmatpush1.msra.mxu0 %v355
    %388 = vmatprep.subr.mxu0 0.0
    %389 = vmatpush1.msra.mxu0 %v354
    %390 = vmatprep.subr.mxu0 0.0
    %391 = vmatpush1.msra.mxu0 %v353
    %392 = vmatprep.subr.mxu0 0.0
    %393 = vmatpush2.msra.mxu0 0.0
    %394 = vmatprep.subr.mxu0 0.0
    %395 = vmatpush2.msra.mxu0 0.0
    %396 = vmatprep.subr.mxu0 0.0
    %397 = vmatpush2.msra.mxu0 0.0
    %398 = vmatprep.subr.mxu0 0.0
    %399 = vmatpush2.msra.mxu0 0.0
    %400 = vmatprep.subr.mxu0 0.0
    %401 = vmatpush2.msra.mxu0 0.0
    %402 = vmatprep.subr.mxu0 0.0
    %403 = vmatpush2.msra.mxu0 0.0
    %404 = vmatprep.subr.mxu0 0.0
    %405 = vmatpush2.msra.mxu0 0.0
    %406 = vmatprep.subr.mxu0 0.0
    %407 = vmatpush2.msra.mxu0 0.0
    %408 = vmatprep.subr.mxu0 0.0
    %409 = vmatpush2.msra.mxu0 0.0
    %410 = vmatprep.subr.mxu0 0.0
    %411 = vmatpush2.msra.mxu0 0.0
    %412 = vmatprep.subr.mxu0 0.0
    %413 = vmatpush2.msra.mxu0 0.0
    %414 = vmatprep.subr.mxu0 0.0
    %415 = vmatpush2.msra.mxu0 0.0
    %416 = vmatprep.subr.mxu0 0.0
    %417 = vmatpush2.msra.mxu0 0.0
    %418 = vmatprep.subr.mxu0 0.0
    %419 = vmatpush2.msra.mxu0 0.0
    %420 = vmatprep.subr.mxu0 0.0
    %421 = vmatpush2.msra.mxu0 0.0
    %422 = vmatprep.subr.mxu0 0.0
    %423 = vmatpush2.msra.mxu0 0.0
    %424 = vmatprep.mubr.f32.mxu0 0.0
    %425 = vmatmul.mubr.f32.gmra.mxu0 %v358
    %v426 = vpop.f32.mrf.mxu0
    %v427 = vadd.f32 0.0, %v426
    %v428 = vpop.f32.mrf.mxu0
    %429 = vdwg.mxu0
    %s430 = scalar_lea.vmem [#allocation7], 32
    %431 = vst.msk [vmem:[%s430] sm:$0xff] %vm45, %v427
    %v432 = vld [vmem:[%s120] sm:$0xff]
    %v433 = vld [vmem:[%s120 + $0x8] sm:$0xff]
    %v434 = vld [vmem:[%s120 + $0x10] sm:$0xff]
    %v435 = vld [vmem:[%s120 + $0x18] sm:$0xff]
    %436 = vmatprep.subr.mxu0 0.0
    %437 = vmatpush1.msra.mxu0 0.0
    %438 = vmatprep.subr.mxu0 0.0
    %439 = vmatpush1.msra.mxu0 0.0
    %440 = vmatprep.subr.mxu0 0.0
    %441 = vmatpush1.msra.mxu0 0.0
    %442 = vmatprep.subr.mxu0 0.0
    %443 = vmatpush1.msra.mxu0 0.0
    %444 = vmatprep.subr.mxu0 0.0
    %445 = vmatpush1.msra.mxu0 0.0
    %446 = vmatprep.subr.mxu0 0.0
    %447 = vmatpush1.msra.mxu0 0.0
    %448 = vmatprep.subr.mxu0 0.0
    %449 = vmatpush1.msra.mxu0 0.0
    %450 = vmatprep.subr.mxu0 0.0
    %451 = vmatpush1.msra.mxu0 0.0
    %452 = vmatprep.subr.mxu0 0.0
    %453 = vmatpush1.msra.mxu0 0.0
    %454 = vmatprep.subr.mxu0 0.0
    %455 = vmatpush1.msra.mxu0 0.0
    %456 = vmatprep.subr.mxu0 0.0
    %457 = vmatpush1.msra.mxu0 0.0
    %458 = vmatprep.subr.mxu0 0.0
    %459 = vmatpush1.msra.mxu0 0.0
    %460 = vmatprep.subr.mxu0 0.0
    %461 = vmatpush1.msra.mxu0 %v435
    %462 = vmatprep.subr.mxu0 0.0
    %463 = vmatpush1.msra.mxu0 %v434
    %464 = vmatprep.subr.mxu0 0.0
    %465 = vmatpush1.msra.mxu0 %v433
    %466 = vmatprep.subr.mxu0 0.0
    %467 = vmatpush1.msra.mxu0 %v432
    %468 = vmatprep.subr.mxu0 0.0
    %469 = vmatpush2.msra.mxu0 0.0
    %470 = vmatprep.subr.mxu0 0.0
    %471 = vmatpush2.msra.mxu0 0.0
    %472 = vmatprep.subr.mxu0 0.0
    %473 = vmatpush2.msra.mxu0 0.0
    %474 = vmatprep.subr.mxu0 0.0
    %475 = vmatpush2.msra.mxu0 0.0
    %476 = vmatprep.subr.mxu0 0.0
    %477 = vmatpush2.msra.mxu0 0.0
    %478 = vmatprep.subr.mxu0 0.0
    %479 = vmatpush2.msra.mxu0 0.0
    %480 = vmatprep.subr.mxu0 0.0
    %481 = vmatpush2.msra.mxu0 0.0
    %482 = vmatprep.subr.mxu0 0.0
    %483 = vmatpush2.msra.mxu0 0.0
    %484 = vmatprep.subr.mxu0 0.0
    %485 = vmatpush2.msra.mxu0 0.0
    %486 = vmatprep.subr.mxu0 0.0
    %487 = vmatpush2.msra.mxu0 0.0
    %488 = vmatprep.subr.mxu0 0.0
    %489 = vmatpush2.msra.mxu0 0.0
    %490 = vmatprep.subr.mxu0 0.0
    %491 = vmatpush2.msra.mxu0 0.0
    %492 = vmatprep.subr.mxu0 0.0
    %493 = vmatpush2.msra.mxu0 0.0
    %494 = vmatprep.subr.mxu0 0.0
    %495 = vmatpush2.msra.mxu0 0.0
    %496 = vmatprep.subr.mxu0 0.0
    %497 = vmatpush2.msra.mxu0 0.0
    %498 = vmatprep.subr.mxu0 0.0
    %499 = vmatpush2.msra.mxu0 0.0
    %500 = vmatprep.mubr.f32.mxu0 0.0
    %501 = vmatmul.mubr.f32.gmra.mxu0 %v358
    %v502 = vpop.f32.mrf.mxu0
    %v503 = vadd.f32 0.0, %v502
    %v504 = vpop.f32.mrf.mxu0
    %505 = vdwg.mxu0
    %s506 = scalar_lea.vmem [#allocation7], 40
    %507 = vst.msk [vmem:[%s506] sm:$0xff] %vm45, %v503
    %v508 = vld [vmem:[%s197] sm:$0xff]
    %v509 = vld [vmem:[%s197 + $0x8] sm:$0xff]
    %v510 = vld [vmem:[%s197 + $0x10] sm:$0xff]
    %v511 = vld [vmem:[%s197 + $0x18] sm:$0xff]
    %512 = vmatprep.subr.mxu0 0.0
    %513 = vmatpush1.msra.mxu0 0.0
    %514 = vmatprep.subr.mxu0 0.0
    %515 = vmatpush1.msra.mxu0 0.0
    %516 = vmatprep.subr.mxu0 0.0
    %517 = vmatpush1.msra.mxu0 0.0
    %518 = vmatprep.subr.mxu0 0.0
    %519 = vmatpush1.msra.mxu0 0.0
    %520 = vmatprep.subr.mxu0 0.0
    %521 = vmatpush1.msra.mxu0 0.0
    %522 = vmatprep.subr.mxu0 0.0
    %523 = vmatpush1.msra.mxu0 0.0
    %524 = vmatprep.subr.mxu0 0.0
    %525 = vmatpush1.msra.mxu0 0.0
    %526 = vmatprep.subr.mxu0 0.0
    %527 = vmatpush1.msra.mxu0 0.0
    %528 = vmatprep.subr.mxu0 0.0
    %529 = vmatpush1.msra.mxu0 0.0
    %530 = vmatprep.subr.mxu0 0.0
    %531 = vmatpush1.msra.mxu0 0.0
    %532 = vmatprep.subr.mxu0 0.0
    %533 = vmatpush1.msra.mxu0 0.0
    %534 = vmatprep.subr.mxu0 0.0
    %535 = vmatpush1.msra.mxu0 0.0
    %536 = vmatprep.subr.mxu0 0.0
    %537 = vmatpush1.msra.mxu0 %v511
    %538 = vmatprep.subr.mxu0 0.0
    %539 = vmatpush1.msra.mxu0 %v510
    %540 = vmatprep.subr.mxu0 0.0
    %541 = vmatpush1.msra.mxu0 %v509
    %542 = vmatprep.subr.mxu0 0.0
    %543 = vmatpush1.msra.mxu0 %v508
    %544 = vmatprep.subr.mxu0 0.0
    %545 = vmatpush2.msra.mxu0 0.0
    %546 = vmatprep.subr.mxu0 0.0
    %547 = vmatpush2.msra.mxu0 0.0
    %548 = vmatprep.subr.mxu0 0.0
    %549 = vmatpush2.msra.mxu0 0.0
    %550 = vmatprep.subr.mxu0 0.0
    %551 = vmatpush2.msra.mxu0 0.0
    %552 = vmatprep.subr.mxu0 0.0
    %553 = vmatpush2.msra.mxu0 0.0
    %554 = vmatprep.subr.mxu0 0.0
    %555 = vmatpush2.msra.mxu0 0.0
    %556 = vmatprep.subr.mxu0 0.0
    %557 = vmatpush2.msra.mxu0 0.0
    %558 = vmatprep.subr.mxu0 0.0
    %559 = vmatpush2.msra.mxu0 0.0
    %560 = vmatprep.subr.mxu0 0.0
    %561 = vmatpush2.msra.mxu0 0.0
    %562 = vmatprep.subr.mxu0 0.0
    %563 = vmatpush2.msra.mxu0 0.0
    %564 = vmatprep.subr.mxu0 0.0
    %565 = vmatpush2.msra.mxu0 0.0
    %566 = vmatprep.subr.mxu0 0.0
    %567 = vmatpush2.msra.mxu0 0.0
    %568 = vmatprep.subr.mxu0 0.0
    %569 = vmatpush2.msra.mxu0 0.0
    %570 = vmatprep.subr.mxu0 0.0
    %571 = vmatpush2.msra.mxu0 0.0
    %572 = vmatprep.subr.mxu0 0.0
    %573 = vmatpush2.msra.mxu0 0.0
    %574 = vmatprep.subr.mxu0 0.0
    %575 = vmatpush2.msra.mxu0 0.0
    %576 = vmatprep.mubr.f32.mxu0 0.0
    %577 = vmatmul.mubr.f32.gmra.mxu0 %v358
    %v578 = vpop.f32.mrf.mxu0
    %v579 = vadd.f32 0.0, %v578
    %v580 = vpop.f32.mrf.mxu0
    %581 = vdwg.mxu0
    %s582 = scalar_lea.vmem [#allocation7], 48
    %583 = vst.msk [vmem:[%s582] sm:$0xff] %vm45, %v579
    %v584 = vld [vmem:[%s274] sm:$0xff]
    %v585 = vld [vmem:[%s274 + $0x8] sm:$0xff]
    %v586 = vld [vmem:[%s274 + $0x10] sm:$0xff]
    %v587 = vld [vmem:[%s274 + $0x18] sm:$0xff]
    %588 = vmatprep.subr.mxu0 0.0
    %589 = vmatpush1.msra.mxu0 0.0
    %590 = vmatprep.subr.mxu0 0.0
    %591 = vmatpush1.msra.mxu0 0.0
    %592 = vmatprep.subr.mxu0 0.0
    %593 = vmatpush1.msra.mxu0 0.0
    %594 = vmatprep.subr.mxu0 0.0
    %595 = vmatpush1.msra.mxu0 0.0
    %596 = vmatprep.subr.mxu0 0.0
    %597 = vmatpush1.msra.mxu0 0.0
    %598 = vmatprep.subr.mxu0 0.0
    %599 = vmatpush1.msra.mxu0 0.0
    %600 = vmatprep.subr.mxu0 0.0
    %601 = vmatpush1.msra.mxu0 0.0
    %602 = vmatprep.subr.mxu0 0.0
    %603 = vmatpush1.msra.mxu0 0.0
    %604 = vmatprep.subr.mxu0 0.0
    %605 = vmatpush1.msra.mxu0 0.0
    %606 = vmatprep.subr.mxu0 0.0
    %607 = vmatpush1.msra.mxu0 0.0
    %608 = vmatprep.subr.mxu0 0.0
    %609 = vmatpush1.msra.mxu0 0.0
    %610 = vmatprep.subr.mxu0 0.0
    %611 = vmatpush1.msra.mxu0 0.0
    %612 = vmatprep.subr.mxu0 0.0
    %613 = vmatpush1.msra.mxu0 %v587
    %614 = vmatprep.subr.mxu0 0.0
    %615 = vmatpush1.msra.mxu0 %v586
    %616 = vmatprep.subr.mxu0 0.0
    %617 = vmatpush1.msra.mxu0 %v585
    %618 = vmatprep.subr.mxu0 0.0
    %619 = vmatpush1.msra.mxu0 %v584
    %620 = vmatprep.subr.mxu0 0.0
    %621 = vmatpush2.msra.mxu0 0.0
    %622 = vmatprep.subr.mxu0 0.0
    %623 = vmatpush2.msra.mxu0 0.0
    %624 = vmatprep.subr.mxu0 0.0
    %625 = vmatpush2.msra.mxu0 0.0
    %626 = vmatprep.subr.mxu0 0.0
    %627 = vmatpush2.msra.mxu0 0.0
    %628 = vmatprep.subr.mxu0 0.0
    %629 = vmatpush2.msra.mxu0 0.0
    %630 = vmatprep.subr.mxu0 0.0
    %631 = vmatpush2.msra.mxu0 0.0
    %632 = vmatprep.subr.mxu0 0.0
    %633 = vmatpush2.msra.mxu0 0.0
    %634 = vmatprep.subr.mxu0 0.0
    %635 = vmatpush2.msra.mxu0 0.0
    %636 = vmatprep.subr.mxu0 0.0
    %637 = vmatpush2.msra.mxu0 0.0
    %638 = vmatprep.subr.mxu0 0.0
    %639 = vmatpush2.msra.mxu0 0.0
    %640 = vmatprep.subr.mxu0 0.0
    %641 = vmatpush2.msra.mxu0 0.0
    %642 = vmatprep.subr.mxu0 0.0
    %643 = vmatpush2.msra.mxu0 0.0
    %644 = vmatprep.subr.mxu0 0.0
    %645 = vmatpush2.msra.mxu0 0.0
    %646 = vmatprep.subr.mxu0 0.0
    %647 = vmatpush2.msra.mxu0 0.0
    %648 = vmatprep.subr.mxu0 0.0
    %649 = vmatpush2.msra.mxu0 0.0
    %650 = vmatprep.subr.mxu0 0.0
    %651 = vmatpush2.msra.mxu0 0.0
    %652 = vmatprep.mubr.f32.mxu0 0.0
    %653 = vmatmul.mubr.f32.gmra.mxu0 %v358
    %v654 = vpop.f32.mrf.mxu0
    %v655 = vadd.f32 0.0, %v654
    %v656 = vpop.f32.mrf.mxu0
    %657 = vdwg.mxu0
    %s658 = scalar_lea.vmem [#allocation7], 56
    %659 = vst.msk [vmem:[%s658] sm:$0xff] %vm45, %v655
    // Predicated region
    $region18: #{tpu_custom_call.1} parent=1 // pred_check
      _
    $region19: #{tpu_custom_call.1} parent=1 // pred_check_branch
      %661 = sbr.rel (0) target = $region21
    $region20: #{tpu_custom_call.1} parent=1 // pred_region
      %s663 = ssub.s32 1024, 1024
      %664 = vsyncadd [#allocation4], %s663
      %s665 = sshll.u32 [#allocation7], 4
      %s666 = int_to_ptr.vmem [resolvable:$true] %s665
      %671 = dma.vmem_to_hbm [thread:$0]  %s666, 1024, %s2, [#allocation4], 128, 128, 8
    $region21: #{tpu_custom_call.1} parent=1 // pred_fallthru
      _
    // Predicated region
    $region22: #{tpu_custom_call.1} parent=1 // pred_check
      _
    $region23: #{tpu_custom_call.1} parent=1 // pred_check_branch
      %673 = sbr.rel (0) target = $region25
    $region24: #{tpu_custom_call.1} parent=1 // pred_region
      %674 = dma.done [#allocation4], 1024
    $region25: #{tpu_custom_call.1} parent=1 // pred_fallthru
      _
    %675 = vsyncpa [#allocation3], 1
    %676 = vsyncpa [#allocation6], 1
    %677 = vsyncpa [#allocation4], 1

// kernel: tpu_custom_call.1
$region0: #{tpu_custom_call.1}
  #allocation0 [shape = 'u32[]', space=smem, size = 0x4, offset = 0x4, fixed_abs, tag = 'smem constant byte address 0x4 - core index']
  #allocation1 [shape = 'u32[144,128]{1,0:T(1,128)}', space=vmem, size = 0x12000, scoped, tag = 'internal scratch']
  %s0 = inlined_call_operand.hbm [shape: f32[2,8,32], index: 0, kind: input, shape index: {}]
  %s1 = inlined_call_operand.hbm [shape: f32[4,32,32], index: 1, kind: input, shape index: {}]
  %s2 = inlined_call_operand.hbm [shape: f32[2,4,8,32], index: 2, kind: output, shape index: {}]
  %s3 = sld [smem:[#allocation0]]
  $region26: #{tpu_custom_call.1} parent=0
    _
  %s5 = ssub.s32 1, %s3
  %s6 = scalar_select 0, %s5, %s3
  $region1: #{tpu_custom_call.1} parent=0
    #allocation2 [shape = 'u8[8192]{0}', space=vmem, size = 0x2000, scoped, tag = 'input window, operand 0, single buffered']
    #allocation3 [shape = 's32[1]{0}', space=sflag, size = 0x4, scoped, tag = 'scoped memory for tpu_custom_call.1']
    #allocation4 [shape = 's32[1]{0}', space=sflag, size = 0x4, scoped, tag = 'scoped memory for tpu_custom_call.1']
    #allocation5 [shape = 'u8[65536]{0}', space=vmem, size = 0x10000, scoped, tag = 'input window, operand 1, single buffered']
    #allocation6 [shape = 's32[1]{0}', space=sflag, size = 0x4, scoped, tag = 'scoped memory for tpu_custom_call.1']
    #allocation7 [shape = 'u8[32768]{0}', space=vmem, size = 0x8000, scoped, tag = 'output window, operand 0, single buffered']
    %7 = vsyncpa [#allocation3], 0
    %8 = vsyncpa [#allocation6], 0
    %9 = vsyncpa [#allocation4], 0
    // Predicated region
    $region2: #{tpu_custom_call.1} parent=1 // pred_check
      _
    $region3: #{tpu_custom_call.1} parent=1 // pred_check_branch
      %11 = sbr.rel (0) target = $region5
    $region4: #{tpu_custom_call.1} parent=1 // pred_region
      %s13 = ssub.s32 256, 256
      %14 = vsyncadd [#allocation3], %s13
      %s15 = sshll.u32 [#allocation2], 4
      %s16 = int_to_ptr.vmem [resolvable:$true] %s15
      %21 = dma.hbm_to_vmem [thread:$0]  %s0, 256, %s16, [#allocation3], 128, 128, 8
    $region5: #{tpu_custom_call.1} parent=1 // pred_fallthru
      _
    // Predicated region
    $region6: #{tpu_custom_call.1} parent=1 // pred_check
      _
    $region7: #{tpu_custom_call.1} parent=1 // pred_check_branch
      %23 = sbr.rel (0) target = $region9
    $region8: #{tpu_custom_call.1} parent=1 // pred_region
      %s25 = ssub.s32 2048, 2048
      %26 = vsyncadd [#allocation6], %s25
      %s27 = sshll.u32 [#allocation5], 4
      %s28 = int_to_ptr.vmem [resolvable:$true] %s27
      %33 = dma.hbm_to_vmem [thread:$0]  %s1, 2048, %s28, [#allocation6], 128, 128, 8
    $region9: #{tpu_custom_call.1} parent=1 // pred_fallthru
      _
    // Predicated region
    $region10: #{tpu_custom_call.1} parent=1 // pred_check
      _
    $region11: #{tpu_custom_call.1} parent=1 // pred_check_branch
      %35 = sbr.rel (0) target = $region13
    $region12: #{tpu_custom_call.1} parent=1 // pred_region
      %36 = dma.done [#allocation3], 256
    $region13: #{tpu_custom_call.1} parent=1 // pred_fallthru
      _
    // Predicated region
    $region14: #{tpu_custom_call.1} parent=1 // pred_check
      _
    $region15: #{tpu_custom_call.1} parent=1 // pred_check_branch
      %38 = sbr.rel (0) target = $region17
    $region16: #{tpu_custom_call.1} parent=1 // pred_region
      %39 = dma.done [#allocation6], 2048
    $region17: #{tpu_custom_call.1} parent=1 // pred_fallthru
      _
    %v40 = vld [vmem:[#allocation2] sm:$0xff]
    %v41 = vld [vmem:[#allocation5] sm:$0xff]
    %v42 = vld [vmem:[#allocation5 + $0x8] sm:$0xff]
    %v43 = vld [vmem:[#allocation5 + $0x10] sm:$0xff]
    %v44 = vld [vmem:[#allocation5 + $0x18] sm:$0xff]
    %vm45 = vcmask 261120
    %v47 = vsel %vm45, %v40, 0
    %49 = vmatprep.subr.mxu0 0.0
    %50 = vmatpush1.msra.mxu0 0.0
    %51 = vmatprep.subr.mxu0 0.0
    %52 = vmatpush1.msra.mxu0 0.0
    %53 = vmatprep.subr.mxu0 0.0
    %54 = vmatpush1.msra.mxu0 0.0
    %55 = vmatprep.subr.mxu0 0.0
    %56 = vmatpush1.msra.mxu0 0.0
    %57 = vmatprep.subr.mxu0 0.0
    %58 = vmatpush1.msra.mxu0 0.0
    %59 = vmatprep.subr.mxu0 0.0
    %60 = vmatpush1.msra.mxu0 0.0
    %61 = vmatprep.subr.mxu0 0.0
    %62 = vmatpush1.msra.mxu0 0.0
    %63 = vmatprep.subr.mxu0 0.0
    %64 = vmatpush1.msra.mxu0 0.0
    %65 = vmatprep.subr.mxu0 0.0
    %66 = vmatpush1.msra.mxu0 0.0
    %67 = vmatprep.subr.mxu0 0.0
    %68 = vmatpush1.msra.mxu0 0.0
    %69 = vmatprep.subr.mxu0 0.0
    %70 = vmatpush1.msra.mxu0 0.0
    %71 = vmatprep.subr.mxu0 0.0
    %72 = vmatpush1.msra.mxu0 0.0
    %73 = vmatprep.subr.mxu0 0.0
    %74 = vmatpush1.msra.mxu0 %v44
    %75 = vmatprep.subr.mxu0 0.0
    %76 = vmatpush1.msra.mxu0 %v43
    %77 = vmatprep.subr.mxu0 0.0
    %78 = vmatpush1.msra.mxu0 %v42
    %79 = vmatprep.subr.mxu0 0.0
    %80 = vmatpush1.msra.mxu0 %v41
    %81 = vmatprep.subr.mxu0 0.0
    %82 = vmatpush2.msra.mxu0 0.0
    %83 = vmatprep.subr.mxu0 0.0
    %84 = vmatpush2.msra.mxu0 0.0
    %85 = vmatprep.subr.mxu0 0.0
    %86 = vmatpush2.msra.mxu0 0.0
    %87 = vmatprep.subr.mxu0 0.0
    %88 = vmatpush2.msra.mxu0 0.0
    %89 = vmatprep.subr.mxu0 0.0
    %90 = vmatpush2.msra.mxu0 0.0
    %91 = vmatprep.subr.mxu0 0.0
    %92 = vmatpush2.msra.mxu0 0.0
    %93 = vmatprep.subr.mxu0 0.0
    %94 = vmatpush2.msra.mxu0 0.0
    %95 = vmatprep.subr.mxu0 0.0
    %96 = vmatpush2.msra.mxu0 0.0
    %97 = vmatprep.subr.mxu0 0.0
    %98 = vmatpush2.msra.mxu0 0.0
    %99 = vmatprep.subr.mxu0 0.0
    %100 = vmatpush2.msra.mxu0 0.0
    %101 = vmatprep.subr.mxu0 0.0
    %102 = vmatpush2.msra.mxu0 0.0
    %103 = vmatprep.subr.mxu0 0.0
    %104 = vmatpush2.msra.mxu0 0.0
    %105 = vmatprep.subr.mxu0 0.0
    %106 = vmatpush2.msra.mxu0 0.0
    %107 = vmatprep.subr.mxu0 0.0
    %108 = vmatpush2.msra.mxu0 0.0
    %109 = vmatprep.subr.mxu0 0.0
    %110 = vmatpush2.msra.mxu0 0.0
    %111 = vmatprep.subr.mxu0 0.0
    %112 = vmatpush2.msra.mxu0 0.0
    %113 = vmatprep.mubr.f32.mxu0 0.0
    %114 = vmatmul.mubr.f32.gmra.mxu0 %v47
    %v115 = vpop.f32.mrf.mxu0
    %v116 = vadd.f32 0.0, %v115
    %v117 = vpop.f32.mrf.mxu0
    %118 = vdwg.mxu0
    %119 = vst.msk [vmem:[#allocation7] sm:$0xff] %vm45, %v116
    %s120 = scalar_lea.vmem [#allocation5], 32
    %v121 = vld [vmem:[%s120] sm:$0xff]
    %v122 = vld [vmem:[%s120 + $0x8] sm:$0xff]
    %v123 = vld [vmem:[%s120 + $0x10] sm:$0xff]
    %v124 = vld [vmem:[%s120 + $0x18] sm:$0xff]
    %125 = vmatprep.subr.mxu0 0.0
    %126 = vmatpush1.msra.mxu0 0.0
    %127 = vmatprep.subr.mxu0 0.0
    %128 = vmatpush1.msra.mxu0 0.0
    %129 = vmatprep.subr.mxu0 0.0
    %130 = vmatpush1.msra.mxu0 0.0
    %131 = vmatprep.subr.mxu0 0.0
    %132 = vmatpush1.msra.mxu0 0.0
    %133 = vmatprep.subr.mxu0 0.0
    %134 = vmatpush1.msra.mxu0 0.0
    %135 = vmatprep.subr.mxu0 0.0
    %136 = vmatpush1.msra.mxu0 0.0
    %137 = vmatprep.subr.mxu0 0.0
    %138 = vmatpush1.msra.mxu0 0.0
    %139 = vmatprep.subr.mxu0 0.0
    %140 = vmatpush1.msra.mxu0 0.0
    %141 = vmatprep.subr.mxu0 0.0
    %142 = vmatpush1.msra.mxu0 0.0
    %143 = vmatprep.subr.mxu0 0.0
    %144 = vmatpush1.msra.mxu0 0.0
    %145 = vmatprep.subr.mxu0 0.0
    %146 = vmatpush1.msra.mxu0 0.0
    %147 = vmatprep.subr.mxu0 0.0
    %148 = vmatpush1.msra.mxu0 0.0
    %149 = vmatprep.subr.mxu0 0.0
    %150 = vmatpush1.msra.mxu0 %v124
    %151 = vmatprep.subr.mxu0 0.0
    %152 = vmatpush1.msra.mxu0 %v123
    %153 = vmatprep.subr.mxu0 0.0
    %154 = vmatpush1.msra.mxu0 %v122
    %155 = vmatprep.subr.mxu0 0.0
    %156 = vmatpush1.msra.mxu0 %v121
    %157 = vmatprep.subr.mxu0 0.0
    %158 = vmatpush2.msra.mxu0 0.0
    %159 = vmatprep.subr.mxu0 0.0
    %160 = vmatpush2.msra.mxu0 0.0
    %161 = vmatprep.subr.mxu0 0.0
    %162 = vmatpush2.msra.mxu0 0.0
    %163 = vmatprep.subr.mxu0 0.0
    %164 = vmatpush2.msra.mxu0 0.0
    %165 = vmatprep.subr.mxu0 0.0
    %166 = vmatpush2.msra.mxu0 0.0
    %167 = vmatprep.subr.mxu0 0.0
    %168 = vmatpush2.msra.mxu0 0.0
    %169 = vmatprep.subr.mxu0 0.0
    %170 = vmatpush2.msra.mxu0 0.0
    %171 = vmatprep.subr.mxu0 0.0
    %172 = vmatpush2.msra.mxu0 0.0
    %173 = vmatprep.subr.mxu0 0.0
    %174 = vmatpush2.msra.mxu0 0.0
    %175 = vmatprep.subr.mxu0 0.0
    %176 = vmatpush2.msra.mxu0 0.0
    %177 = vmatprep.subr.mxu0 0.0
    %178 = vmatpush2.msra.mxu0 0.0
    %179 = vmatprep.subr.mxu0 0.0
    %180 = vmatpush2.msra.mxu0 0.0
    %181 = vmatprep.subr.mxu0 0.0
    %182 = vmatpush2.msra.mxu0 0.0
    %183 = vmatprep.subr.mxu0 0.0
    %184 = vmatpush2.msra.mxu0 0.0
    %185 = vmatprep.subr.mxu0 0.0
    %186 = vmatpush2.msra.mxu0 0.0
    %187 = vmatprep.subr.mxu0 0.0
    %188 = vmatpush2.msra.mxu0 0.0
    %189 = vmatprep.mubr.f32.mxu0 0.0
    %190 = vmatmul.mubr.f32.gmra.mxu0 %v47
    %v191 = vpop.f32.mrf.mxu0
    %v192 = vadd.f32 0.0, %v191
    %v193 = vpop.f32.mrf.mxu0
    %194 = vdwg.mxu0
    %s195 = scalar_lea.vmem [#allocation7], 8
    %196 = vst.msk [vmem:[%s195] sm:$0xff] %vm45, %v192
    %s197 = scalar_lea.vmem [#allocation5], 64
    %v198 = vld [vmem:[%s197] sm:$0xff]
    %v199 = vld [vmem:[%s197 + $0x8] sm:$0xff]
    %v200 = vld [vmem:[%s197 + $0x10] sm:$0xff]
    %v201 = vld [vmem:[%s197 + $0x18] sm:$0xff]
    %202 = vmatprep.subr.mxu0 0.0
    %203 = vmatpush1.msra.mxu0 0.0
    %204 = vmatprep.subr.mxu0 0.0
    %205 = vmatpush1.msra.mxu0 0.0
    %206 = vmatprep.subr.mxu0 0.0
    %207 = vmatpush1.msra.mxu0 0.0
    %208 = vmatprep.subr.mxu0 0.0
    %209 = vmatpush1.msra.mxu0 0.0
    %210 = vmatprep.subr.mxu0 0.0
    %211 = vmatpush1.msra.mxu0 0.0
    %212 = vmatprep.subr.mxu0 0.0
    %213 = vmatpush1.msra.mxu0 0.0
    %214 = vmatprep.subr.mxu0 0.0
    %215 = vmatpush1.msra.mxu0 0.0
    %216 = vmatprep.subr.mxu0 0.0
    %217 = vmatpush1.msra.mxu0 0.0
    %218 = vmatprep.subr.mxu0 0.0
    %219 = vmatpush1.msra.mxu0 0.0
    %220 = vmatprep.subr.mxu0 0.0
    %221 = vmatpush1.msra.mxu0 0.0
    %222 = vmatprep.subr.mxu0 0.0
    %223 = vmatpush1.msra.mxu0 0.0
    %224 = vmatprep.subr.mxu0 0.0
    %225 = vmatpush1.msra.mxu0 0.0
    %226 = vmatprep.subr.mxu0 0.0
    %227 = vmatpush1.msra.mxu0 %v201
    %228 = vmatprep.subr.mxu0 0.0
    %229 = vmatpush1.msra.mxu0 %v200
    %230 = vmatprep.subr.mxu0 0.0
    %231 = vmatpush1.msra.mxu0 %v199
    %232 = vmatprep.subr.mxu0 0.0
    %233 = vmatpush1.msra.mxu0 %v198
    %234 = vmatprep.subr.mxu0 0.0
    %235 = vmatpush2.msra.mxu0 0.0
    %236 = vmatprep.subr.mxu0 0.0
    %237 = vmatpush2.msra.mxu0 0.0
    %238 = vmatprep.subr.mxu0 0.0
    %239 = vmatpush2.msra.mxu0 0.0
    %240 = vmatprep.subr.mxu0 0.0
    %241 = vmatpush2.msra.mxu0 0.0
    %242 = vmatprep.subr.mxu0 0.0
    %243 = vmatpush2.msra.mxu0 0.0
    %244 = vmatprep.subr.mxu0 0.0
    %245 = vmatpush2.msra.mxu0 0.0
    %246 = vmatprep.subr.mxu0 0.0
    %247 = vmatpush2.msra.mxu0 0.0
    %248 = vmatprep.subr.mxu0 0.0
    %249 = vmatpush2.msra.mxu0 0.0
    %250 = vmatprep.subr.mxu0 0.0
    %251 = vmatpush2.msra.mxu0 0.0
    %252 = vmatprep.subr.mxu0 0.0
    %253 = vmatpush2.msra.mxu0 0.0
    %254 = vmatprep.subr.mxu0 0.0
    %255 = vmatpush2.msra.mxu0 0.0
    %256 = vmatprep.subr.mxu0 0.0
    %257 = vmatpush2.msra.mxu0 0.0
    %258 = vmatprep.subr.mxu0 0.0
    %259 = vmatpush2.msra.mxu0 0.0
    %260 = vmatprep.subr.mxu0 0.0
    %261 = vmatpush2.msra.mxu0 0.0
    %262 = vmatprep.subr.mxu0 0.0
    %263 = vmatpush2.msra.mxu0 0.0
    %264 = vmatprep.subr.mxu0 0.0
    %265 = vmatpush2.msra.mxu0 0.0
    %266 = vmatprep.mubr.f32.mxu0 0.0
    %267 = vmatmul.mubr.f32.gmra.mxu0 %v47
    %v268 = vpop.f32.mrf.mxu0
    %v269 = vadd.f32 0.0, %v268
    %v270 = vpop.f32.mrf.mxu0
    %271 = vdwg.mxu0
    %s272 = scalar_lea.vmem [#allocation7], 16
    %273 = vst.msk [vmem:[%s272] sm:$0xff] %vm45, %v269
    %s274 = scalar_lea.vmem [#allocation5], 96
    %v275 = vld [vmem:[%s274] sm:$0xff]
    %v276 = vld [vmem:[%s274 + $0x8] sm:$0xff]
    %v277 = vld [vmem:[%s274 + $0x10] sm:$0xff]
    %v278 = vld [vmem:[%s274 + $0x18] sm:$0xff]
    %279 = vmatprep.subr.mxu0 0.0
    %280 = vmatpush1.msra.mxu0 0.0
    %281 = vmatprep.subr.mxu0 0.0
    %282 = vmatpush1.msra.mxu0 0.0
    %283 = vmatprep.subr.mxu0 0.0
    %284 = vmatpush1.msra.mxu0 0.0
    %285 = vmatprep.subr.mxu0 0.0
    %286 = vmatpush1.msra.mxu0 0.0
    %287 = vmatprep.subr.mxu0 0.0
    %288 = vmatpush1.msra.mxu0 0.0
    %289 = vmatprep.subr.mxu0 0.0
    %290 = vmatpush1.msra.mxu0 0.0
    %291 = vmatprep.subr.mxu0 0.0
    %292 = vmatpush1.msra.mxu0 0.0
    %293 = vmatprep.subr.mxu0 0.0
    %294 = vmatpush1.msra.mxu0 0.0
    %295 = vmatprep.subr.mxu0 0.0
    %296 = vmatpush1.msra.mxu0 0.0
    %297 = vmatprep.subr.mxu0 0.0
    %298 = vmatpush1.msra.mxu0 0.0
    %299 = vmatprep.subr.mxu0 0.0
    %300 = vmatpush1.msra.mxu0 0.0
    %301 = vmatprep.subr.mxu0 0.0
    %302 = vmatpush1.msra.mxu0 0.0
    %303 = vmatprep.subr.mxu0 0.0
    %304 = vmatpush1.msra.mxu0 %v278
    %305 = vmatprep.subr.mxu0 0.0
    %306 = vmatpush1.msra.mxu0 %v277
    %307 = vmatprep.subr.mxu0 0.0
    %308 = vmatpush1.msra.mxu0 %v276
    %309 = vmatprep.subr.mxu0 0.0
    %310 = vmatpush1.msra.mxu0 %v275
    %311 = vmatprep.subr.mxu0 0.0
    %312 = vmatpush2.msra.mxu0 0.0
    %313 = vmatprep.subr.mxu0 0.0
    %314 = vmatpush2.msra.mxu0 0.0
    %315 = vmatprep.subr.mxu0 0.0
    %316 = vmatpush2.msra.mxu0 0.0
    %317 = vmatprep.subr.mxu0 0.0
    %318 = vmatpush2.msra.mxu0 0.0
    %319 = vmatprep.subr.mxu0 0.0
    %320 = vmatpush2.msra.mxu0 0.0
    %321 = vmatprep.subr.mxu0 0.0
    %322 = vmatpush2.msra.mxu0 0.0
    %323 = vmatprep.subr.mxu0 0.0
    %324 = vmatpush2.msra.mxu0 0.0
    %325 = vmatprep.subr.mxu0 0.0
    %326 = vmatpush2.msra.mxu0 0.0
    %327 = vmatprep.subr.mxu0 0.0
    %328 = vmatpush2.msra.mxu0 0.0
    %329 = vmatprep.subr.mxu0 0.0
    %330 = vmatpush2.msra.mxu0 0.0
    %331 = vmatprep.subr.mxu0 0.0
    %332 = vmatpush2.msra.mxu0 0.0
    %333 = vmatprep.subr.mxu0 0.0
    %334 = vmatpush2.msra.mxu0 0.0
    %335 = vmatprep.subr.mxu0 0.0
    %336 = vmatpush2.msra.mxu0 0.0
    %337 = vmatprep.subr.mxu0 0.0
    %338 = vmatpush2.msra.mxu0 0.0
    %339 = vmatprep.subr.mxu0 0.0
    %340 = vmatpush2.msra.mxu0 0.0
    %341 = vmatprep.subr.mxu0 0.0
    %342 = vmatpush2.msra.mxu0 0.0
    %343 = vmatprep.mubr.f32.mxu0 0.0
    %344 = vmatmul.mubr.f32.gmra.mxu0 %v47
    %v345 = vpop.f32.mrf.mxu0
    %v346 = vadd.f32 0.0, %v345
    %v347 = vpop.f32.mrf.mxu0
    %348 = vdwg.mxu0
    %s349 = scalar_lea.vmem [#allocation7], 24
    %350 = vst.msk [vmem:[%s349] sm:$0xff] %vm45, %v346
    %s351 = scalar_lea.vmem [#allocation2], 8
    %v352 = vld [vmem:[%s351] sm:$0xff]
    %v353 = vld [vmem:[#allocation5] sm:$0xff]
    %v354 = vld [vmem:[#allocation5 + $0x8] sm:$0xff]
    %v355 = vld [vmem:[#allocation5 + $0x10] sm:$0xff]
    %v356 = vld [vmem:[#allocation5 + $0x18] sm:$0xff]
    %v358 = vsel %vm45, %v352, 0
    %360 = vmatprep.subr.mxu0 0.0
    %361 = vmatpush1.msra.mxu0 0.0
    %362 = vmatprep.subr.mxu0 0.0
    %363 = vmatpush1.msra.mxu0 0.0
    %364 = vmatprep.subr.mxu0 0.0
    %365 = vmatpush1.msra.mxu0 0.0
    %366 = vmatprep.subr.mxu0 0.0
    %367 = vmatpush1.msra.mxu0 0.0
    %368 = vmatprep.subr.mxu0 0.0
    %369 = vmatpush1.msra.mxu0 0.0
    %370 = vmatprep.subr.mxu0 0.0
    %371 = vmatpush1.msra.mxu0 0.0
    %372 = vmatprep.subr.mxu0 0.0
    %373 = vmatpush1.msra.mxu0 0.0
    %374 = vmatprep.subr.mxu0 0.0
    %375 = vmatpush1.msra.mxu0 0.0
    %376 = vmatprep.subr.mxu0 0.0
    %377 = vmatpush1.msra.mxu0 0.0
    %378 = vmatprep.subr.mxu0 0.0
    %379 = vmatpush1.msra.mxu0 0.0
    %380 = vmatprep.subr.mxu0 0.0
    %381 = vmatpush1.msra.mxu0 0.0
    %382 = vmatprep.subr.mxu0 0.0
    %383 = vmatpush1.msra.mxu0 0.0
    %384 = vmatprep.subr.mxu0 0.0
    %385 = vmatpush1.msra.mxu0 %v356
    %386 = vmatprep.subr.mxu0 0.0
    %387 = vmatpush1.msra.mxu0 %v355
    %388 = vmatprep.subr.mxu0 0.0
    %389 = vmatpush1.msra.mxu0 %v354
    %390 = vmatprep.subr.mxu0 0.0
    %391 = vmatpush1.msra.mxu0 %v353
    %392 = vmatprep.subr.mxu0 0.0
    %393 = vmatpush2.msra.mxu0 0.0
    %394 = vmatprep.subr.mxu0 0.0
    %395 = vmatpush2.msra.mxu0 0.0
    %396 = vmatprep.subr.mxu0 0.0
    %397 = vmatpush2.msra.mxu0 0.0
    %398 = vmatprep.subr.mxu0 0.0
    %399 = vmatpush2.msra.mxu0 0.0
    %400 = vmatprep.subr.mxu0 0.0
    %401 = vmatpush2.msra.mxu0 0.0
    %402 = vmatprep.subr.mxu0 0.0
    %403 = vmatpush2.msra.mxu0 0.0
    %404 = vmatprep.subr.mxu0 0.0
    %405 = vmatpush2.msra.mxu0 0.0
    %406 = vmatprep.subr.mxu0 0.0
    %407 = vmatpush2.msra.mxu0 0.0
    %408 = vmatprep.subr.mxu0 0.0
    %409 = vmatpush2.msra.mxu0 0.0
    %410 = vmatprep.subr.mxu0 0.0
    %411 = vmatpush2.msra.mxu0 0.0
    %412 = vmatprep.subr.mxu0 0.0
    %413 = vmatpush2.msra.mxu0 0.0
    %414 = vmatprep.subr.mxu0 0.0
    %415 = vmatpush2.msra.mxu0 0.0
    %416 = vmatprep.subr.mxu0 0.0
    %417 = vmatpush2.msra.mxu0 0.0
    %418 = vmatprep.subr.mxu0 0.0
    %419 = vmatpush2.msra.mxu0 0.0
    %420 = vmatprep.subr.mxu0 0.0
    %421 = vmatpush2.msra.mxu0 0.0
    %422 = vmatprep.subr.mxu0 0.0
    %423 = vmatpush2.msra.mxu0 0.0
    %424 = vmatprep.mubr.f32.mxu0 0.0
    %425 = vmatmul.mubr.f32.gmra.mxu0 %v358
    %v426 = vpop.f32.mrf.mxu0
    %v427 = vadd.f32 0.0, %v426
    %v428 = vpop.f32.mrf.mxu0
    %429 = vdwg.mxu0
    %s430 = scalar_lea.vmem [#allocation7], 32
    %431 = vst.msk [vmem:[%s430] sm:$0xff] %vm45, %v427
    %v432 = vld [vmem:[%s120] sm:$0xff]
    %v433 = vld [vmem:[%s120 + $0x8] sm:$0xff]
    %v434 = vld [vmem:[%s120 + $0x10] sm:$0xff]
    %v435 = vld [vmem:[%s120 + $0x18] sm:$0xff]
    %436 = vmatprep.subr.mxu0 0.0
    %437 = vmatpush1.msra.mxu0 0.0
    %438 = vmatprep.subr.mxu0 0.0
    %439 = vmatpush1.msra.mxu0 0.0
    %440 = vmatprep.subr.mxu0 0.0
    %441 = vmatpush1.msra.mxu0 0.0
    %442 = vmatprep.subr.mxu0 0.0
    %443 = vmatpush1.msra.mxu0 0.0
    %444 = vmatprep.subr.mxu0 0.0
    %445 = vmatpush1.msra.mxu0 0.0
    %446 = vmatprep.subr.mxu0 0.0
    %447 = vmatpush1.msra.mxu0 0.0
    %448 = vmatprep.subr.mxu0 0.0
    %449 = vmatpush1.msra.mxu0 0.0
    %450 = vmatprep.subr.mxu0 0.0
    %451 = vmatpush1.msra.mxu0 0.0
    %452 = vmatprep.subr.mxu0 0.0
    %453 = vmatpush1.msra.mxu0 0.0
    %454 = vmatprep.subr.mxu0 0.0
    %455 = vmatpush1.msra.mxu0 0.0
    %456 = vmatprep.subr.mxu0 0.0
    %457 = vmatpush1.msra.mxu0 0.0
    %458 = vmatprep.subr.mxu0 0.0
    %459 = vmatpush1.msra.mxu0 0.0
    %460 = vmatprep.subr.mxu0 0.0
    %461 = vmatpush1.msra.mxu0 %v435
    %462 = vmatprep.subr.mxu0 0.0
    %463 = vmatpush1.msra.mxu0 %v434
    %464 = vmatprep.subr.mxu0 0.0
    %465 = vmatpush1.msra.mxu0 %v433
    %466 = vmatprep.subr.mxu0 0.0
    %467 = vmatpush1.msra.mxu0 %v432
    %468 = vmatprep.subr.mxu0 0.0
    %469 = vmatpush2.msra.mxu0 0.0
    %470 = vmatprep.subr.mxu0 0.0
    %471 = vmatpush2.msra.mxu0 0.0
    %472 = vmatprep.subr.mxu0 0.0
    %473 = vmatpush2.msra.mxu0 0.0
    %474 = vmatprep.subr.mxu0 0.0
    %475 = vmatpush2.msra.mxu0 0.0
    %476 = vmatprep.subr.mxu0 0.0
    %477 = vmatpush2.msra.mxu0 0.0
    %478 = vmatprep.subr.mxu0 0.0
    %479 = vmatpush2.msra.mxu0 0.0
    %480 = vmatprep.subr.mxu0 0.0
    %481 = vmatpush2.msra.mxu0 0.0
    %482 = vmatprep.subr.mxu0 0.0
    %483 = vmatpush2.msra.mxu0 0.0
    %484 = vmatprep.subr.mxu0 0.0
    %485 = vmatpush2.msra.mxu0 0.0
    %486 = vmatprep.subr.mxu0 0.0
    %487 = vmatpush2.msra.mxu0 0.0
    %488 = vmatprep.subr.mxu0 0.0
    %489 = vmatpush2.msra.mxu0 0.0
    %490 = vmatprep.subr.mxu0 0.0
    %491 = vmatpush2.msra.mxu0 0.0
    %492 = vmatprep.subr.mxu0 0.0
    %493 = vmatpush2.msra.mxu0 0.0
    %494 = vmatprep.subr.mxu0 0.0
    %495 = vmatpush2.msra.mxu0 0.0
    %496 = vmatprep.subr.mxu0 0.0
    %497 = vmatpush2.msra.mxu0 0.0
    %498 = vmatprep.subr.mxu0 0.0
    %499 = vmatpush2.msra.mxu0 0.0
    %500 = vmatprep.mubr.f32.mxu0 0.0
    %501 = vmatmul.mubr.f32.gmra.mxu0 %v358
    %v502 = vpop.f32.mrf.mxu0
    %v503 = vadd.f32 0.0, %v502
    %v504 = vpop.f32.mrf.mxu0
    %505 = vdwg.mxu0
    %s506 = scalar_lea.vmem [#allocation7], 40
    %507 = vst.msk [vmem:[%s506] sm:$0xff] %vm45, %v503
    %v508 = vld [vmem:[%s197] sm:$0xff]
    %v509 = vld [vmem:[%s197 + $0x8] sm:$0xff]
    %v510 = vld [vmem:[%s197 + $0x10] sm:$0xff]
    %v511 = vld [vmem:[%s197 + $0x18] sm:$0xff]
    %512 = vmatprep.subr.mxu0 0.0
    %513 = vmatpush1.msra.mxu0 0.0
    %514 = vmatprep.subr.mxu0 0.0
    %515 = vmatpush1.msra.mxu0 0.0
    %516 = vmatprep.subr.mxu0 0.0
    %517 = vmatpush1.msra.mxu0 0.0
    %518 = vmatprep.subr.mxu0 0.0
    %519 = vmatpush1.msra.mxu0 0.0
    %520 = vmatprep.subr.mxu0 0.0
    %521 = vmatpush1.msra.mxu0 0.0
    %522 = vmatprep.subr.mxu0 0.0
    %523 = vmatpush1.msra.mxu0 0.0
    %524 = vmatprep.subr.mxu0 0.0
    %525 = vmatpush1.msra.mxu0 0.0
    %526 = vmatprep.subr.mxu0 0.0
    %527 = vmatpush1.msra.mxu0 0.0
    %528 = vmatprep.subr.mxu0 0.0
    %529 = vmatpush1.msra.mxu0 0.0
    %530 = vmatprep.subr.mxu0 0.0
    %531 = vmatpush1.msra.mxu0 0.0
    %532 = vmatprep.subr.mxu0 0.0
    %533 = vmatpush1.msra.mxu0 0.0
    %534 = vmatprep.subr.mxu0 0.0
    %535 = vmatpush1.msra.mxu0 0.0
    %536 = vmatprep.subr.mxu0 0.0
    %537 = vmatpush1.msra.mxu0 %v511
    %538 = vmatprep.subr.mxu0 0.0
    %539 = vmatpush1.msra.mxu0 %v510
    %540 = vmatprep.subr.mxu0 0.0
    %541 = vmatpush1.msra.mxu0 %v509
    %542 = vmatprep.subr.mxu0 0.0
    %543 = vmatpush1.msra.mxu0 %v508
    %544 = vmatprep.subr.mxu0 0.0
    %545 = vmatpush2.msra.mxu0 0.0
    %546 = vmatprep.subr.mxu0 0.0
    %547 = vmatpush2.msra.mxu0 0.0
    %548 = vmatprep.subr.mxu0 0.0
    %549 = vmatpush2.msra.mxu0 0.0
    %550 = vmatprep.subr.mxu0 0.0
    %551 = vmatpush2.msra.mxu0 0.0
    %552 = vmatprep.subr.mxu0 0.0
    %553 = vmatpush2.msra.mxu0 0.0
    %554 = vmatprep.subr.mxu0 0.0
    %555 = vmatpush2.msra.mxu0 0.0
    %556 = vmatprep.subr.mxu0 0.0
    %557 = vmatpush2.msra.mxu0 0.0
    %558 = vmatprep.subr.mxu0 0.0
    %559 = vmatpush2.msra.mxu0 0.0
    %560 = vmatprep.subr.mxu0 0.0
    %561 = vmatpush2.msra.mxu0 0.0
    %562 = vmatprep.subr.mxu0 0.0
    %563 = vmatpush2.msra.mxu0 0.0
    %564 = vmatprep.subr.mxu0 0.0
    %565 = vmatpush2.msra.mxu0 0.0
    %566 = vmatprep.subr.mxu0 0.0
    %567 = vmatpush2.msra.mxu0 0.0
    %568 = vmatprep.subr.mxu0 0.0
    %569 = vmatpush2.msra.mxu0 0.0
    %570 = vmatprep.subr.mxu0 0.0
    %571 = vmatpush2.msra.mxu0 0.0
    %572 = vmatprep.subr.mxu0 0.0
    %573 = vmatpush2.msra.mxu0 0.0
    %574 = vmatprep.subr.mxu0 0.0
    %575 = vmatpush2.msra.mxu0 0.0
    %576 = vmatprep.mubr.f32.mxu0 0.0
    %577 = vmatmul.mubr.f32.gmra.mxu0 %v358
    %v578 = vpop.f32.mrf.mxu0
    %v579 = vadd.f32 0.0, %v578
    %v580 = vpop.f32.mrf.mxu0
    %581 = vdwg.mxu0
    %s582 = scalar_lea.vmem [#allocation7], 48
    %583 = vst.msk [vmem:[%s582] sm:$0xff] %vm45, %v579
    %v584 = vld [vmem:[%s274] sm:$0xff]
    %v585 = vld [vmem:[%s274 + $0x8] sm:$0xff]
    %v586 = vld [vmem:[%s274 + $0x10] sm:$0xff]
    %v587 = vld [vmem:[%s274 + $0x18] sm:$0xff]
    %588 = vmatprep.subr.mxu0 0.0
    %589 = vmatpush1.msra.mxu0 0.0
    %590 = vmatprep.subr.mxu0 0.0
    %591 = vmatpush1.msra.mxu0 0.0
    %592 = vmatprep.subr.mxu0 0.0
    %593 = vmatpush1.msra.mxu0 0.0
    %594 = vmatprep.subr.mxu0 0.0
    %595 = vmatpush1.msra.mxu0 0.0
    %596 = vmatprep.subr.mxu0 0.0
    %597 = vmatpush1.msra.mxu0 0.0
    %598 = vmatprep.subr.mxu0 0.0
    %599 = vmatpush1.msra.mxu0 0.0
    %600 = vmatprep.subr.mxu0 0.0
    %601 = vmatpush1.msra.mxu0 0.0
    %602 = vmatprep.subr.mxu0 0.0
    %603 = vmatpush1.msra.mxu0 0.0
    %604 = vmatprep.subr.mxu0 0.0
    %605 = vmatpush1.msra.mxu0 0.0
    %606 = vmatprep.subr.mxu0 0.0
    %607 = vmatpush1.msra.mxu0 0.0
    %608 = vmatprep.subr.mxu0 0.0
    %609 = vmatpush1.msra.mxu0 0.0
    %610 = vmatprep.subr.mxu0 0.0
    %611 = vmatpush1.msra.mxu0 0.0
    %612 = vmatprep.subr.mxu0 0.0
    %613 = vmatpush1.msra.mxu0 %v587
    %614 = vmatprep.subr.mxu0 0.0
    %615 = vmatpush1.msra.mxu0 %v586
    %616 = vmatprep.subr.mxu0 0.0
    %617 = vmatpush1.msra.mxu0 %v585
    %618 = vmatprep.subr.mxu0 0.0
    %619 = vmatpush1.msra.mxu0 %v584
    %620 = vmatprep.subr.mxu0 0.0
    %621 = vmatpush2.msra.mxu0 0.0
    %622 = vmatprep.subr.mxu0 0.0
    %623 = vmatpush2.msra.mxu0 0.0
    %624 = vmatprep.subr.mxu0 0.0
    %625 = vmatpush2.msra.mxu0 0.0
    %626 = vmatprep.subr.mxu0 0.0
    %627 = vmatpush2.msra.mxu0 0.0
    %628 = vmatprep.subr.mxu0 0.0
    %629 = vmatpush2.msra.mxu0 0.0
    %630 = vmatprep.subr.mxu0 0.0
    %631 = vmatpush2.msra.mxu0 0.0
    %632 = vmatprep.subr.mxu0 0.0
    %633 = vmatpush2.msra.mxu0 0.0
    %634 = vmatprep.subr.mxu0 0.0
    %635 = vmatpush2.msra.mxu0 0.0
    %636 = vmatprep.subr.mxu0 0.0
    %637 = vmatpush2.msra.mxu0 0.0
    %638 = vmatprep.subr.mxu0 0.0
    %639 = vmatpush2.msra.mxu0 0.0
    %640 = vmatprep.subr.mxu0 0.0
    %641 = vmatpush2.msra.mxu0 0.0
    %642 = vmatprep.subr.mxu0 0.0
    %643 = vmatpush2.msra.mxu0 0.0
    %644 = vmatprep.subr.mxu0 0.0
    %645 = vmatpush2.msra.mxu0 0.0
    %646 = vmatprep.subr.mxu0 0.0
    %647 = vmatpush2.msra.mxu0 0.0
    %648 = vmatprep.subr.mxu0 0.0
    %649 = vmatpush2.msra.mxu0 0.0
    %650 = vmatprep.subr.mxu0 0.0
    %651 = vmatpush2.msra.mxu0 0.0
    %652 = vmatprep.mubr.f32.mxu0 0.0
    %653 = vmatmul.mubr.f32.gmra.mxu0 %v358
    %v654 = vpop.f32.mrf.mxu0
    %v655 = vadd.f32 0.0, %v654
    %v656 = vpop.f32.mrf.mxu0
    %657 = vdwg.mxu0
    %s658 = scalar_lea.vmem [#allocation7], 56
    %659 = vst.msk [vmem:[%s658] sm:$0xff] %vm45, %v655
    // Predicated region
    $region18: #{tpu_custom_call.1} parent=1 // pred_check
      _
    $region19: #{tpu_custom_call.1} parent=1 // pred_check_branch
      %661 = sbr.rel (0) target = $region21
    $region20: #{tpu_custom_call.1} parent=1 // pred_region
      %s663 = ssub.s32 1024, 1024
      %664 = vsyncadd [#allocation4], %s663
      %s665 = sshll.u32 [#allocation7], 4
      %s666 = int_to_ptr.vmem [resolvable:$true] %s665
      %671 = dma.vmem_to_hbm [thread:$0]  %s666, 1024, %s2, [#allocation4], 128, 128, 8
    $region21: #{tpu_custom_call.1} parent=1 // pred_fallthru
      _
    // Predicated region
    $region22: #{tpu_custom_call.1} parent=1 // pred_check
      _
    $region23: #{tpu_custom_call.1} parent=1 // pred_check_branch
      %673 = sbr.rel (0) target = $region25
    $region24: #{tpu_custom_call.1} parent=1 // pred_region
      %674 = dma.done [#allocation4], 1024
    $region25: #{tpu_custom_call.1} parent=1 // pred_fallthru
      _
    %675 = vsyncpa [#allocation3], 1
    %676 = vsyncpa [#allocation6], 1
    %677 = vsyncpa [#allocation4], 1

</llo_original>
